<compile_context>
chip_gen: v7x
topology: tpu7x:2x2x1
jax: 0.10.0
libtpu: 0.0.40
codegen_flags: <defaults>
</compile_context>

<pallas_src>
import functools

import jax
import jax.numpy as jnp
import numpy as np
from jax.experimental import pallas as pl
from jax.experimental.pallas import tpu as pltpu


def _round_up(x, m):
    return (x + m - 1) // m * m


def _cfconv1_kernel(xpad_ref, wcg_ref, o_ref, *, fh, fw_pad, w_pad, ci):
    # xpad_ref: (Ci, P_ext)      zero-padded input, channel-major, flat padded spatial grid
    # wcg_ref:  (fh*fw_pad, Ci)  fused tap weights Wc = W2_taps @ W1; inside each kh group
    #                            the kw order is reversed and rows are zero-padded to
    #                            fw_pad (a multiple of 8) so one strided roll (stride=+1)
    #                            shifts the whole group.
    # o_ref:    (1, P_ext)       lane-dense output row; out[p] lives at lane s_max + p.
    x = xpad_ref[...]                                   # (Ci, P_ext)
    wcg = wcg_ref[...]                                  # (fh*fw_pad, Ci)

    acc = None
    for kh in range(fh):
        # sublane-tile-aligned row group for this kh (row r <-> tap kw = fw-1-r)
        wk = wcg[kh * fw_pad:(kh + 1) * fw_pad, :]      # (fw_pad, Ci)

        # channel contraction on the VPU: exact f32, K = Ci is tiny -> skip the MXU
        slab = wk[:, 0:1] * x[0:1, :]                   # (fw_pad, P_ext)
        for c in range(1, ci):
            slab = slab + wk[:, c:c + 1] * x[c:c + 1, :]

        # tap shifts for the whole kh group in ONE strided lane rotate:
        # row r needs roll amount (fh-1-kh)*w_pad + r  (np.roll convention), which
        # places tap (kh, kw=fw-1-r) so that lane (s_max + p) reads
        # slab[r, p + kh*w_pad + kw].  All amounts are small and positive.
        rolled = pltpu.roll(slab, shift=(fh - 1 - kh) * w_pad, axis=1,
                            stride=1, stride_axis=0)
        acc = rolled if acc is None else acc + rolled

    # fold the fw_pad tap rows (zero-weight padding rows contribute 0) with a
    # single sublane reduction; full-width unmasked store (P_ext % 128 == 0).
    o_ref[...] = jnp.sum(acc, axis=0, keepdims=True)


@functools.partial(jax.jit, static_argnames=("rh", "rw"))
def cfconv1_forward(x, w1, b1, w2, b2, *, rh, rw):
    """CFConv1Net forward: conv1 (1x1) -> cf ((fh,fw) kernel, padding (rh,rw))."""
    n, c_in, h, w = x.shape
    c_out = w1.shape[0]
    fh, fw = w2.shape[2], w2.shape[3]
    assert w1.shape == (c_out, c_in, 1, 1)
    assert w2.shape[:2] == (1, c_out)
    assert (fh, fw) == (2 * rh + 1, 2 * rw + 1)

    f32 = jnp.float32
    highest = jax.lax.Precision.HIGHEST     # one-time tiny weight folds; exactness matters

    h_pad, w_pad = h + 2 * rh, w + 2 * rw
    p_out = n * h_pad * w_pad               # flat padded-spatial grid size
    s_max = (fh - 1) * w_pad + (fw - 1)     # largest tap shift
    p_ext = _round_up(p_out + s_max, 128)   # lane-dense working width
    fw_pad = _round_up(fw, 8)               # one (or more) full sublane tiles per kh group

    # ---- fold conv1 into the cf taps: Wc[kh,kw,:] = W2[0,:,kh,kw] @ W1  (exact) ----
    w2t = w2.reshape(c_out, fh * fw).T.astype(f32)      # (fh*fw, Co), row t = kh*fw + kw
    w1m = w1.reshape(c_out, c_in).astype(f32)           # (Co, Ci)
    wc = jnp.matmul(w2t, w1m, precision=highest).reshape(fh, fw, c_in)
    # reverse kw inside each kh group (so the strided roll can use stride=+1) and
    # zero-pad each group to fw_pad rows (zero rows contribute exactly 0).
    wcg = jnp.zeros((fh, fw_pad, c_in), f32).at[:, :fw, :].set(wc[:, ::-1, :])
    wcg = wcg.reshape(fh * fw_pad, c_in)

    # ---- input: channel-major over the flat zero-padded spatial grid, zero lane tail ----
    xp = jnp.pad(x.astype(f32), ((0, 0), (0, 0), (rh, rh), (rw, rw)))
    xp_t = xp.transpose(1, 0, 2, 3).reshape(c_in, p_out)
    xp_t = jnp.pad(xp_t, ((0, 0), (0, p_ext - p_out)))

    kernel = functools.partial(_cfconv1_kernel, fh=fh, fw_pad=fw_pad, w_pad=w_pad, ci=c_in)
    vmem = pltpu.MemorySpace.VMEM
    # Single gridless invocation: whole problem (~(Ci + fw_pad + 1) * P_ext * 4 B ≈ 60 KB
    # here) lives in VMEM, far under every generation's scoped-VMEM limit.
    # TODO(synk): for production sizes add a "parallel" grid over lane chunks of the flat
    # spatial axis (with an s_max-lane halo) to use v7x's second TensorCore and respect
    # the smaller v5e (16 MiB) / v7x (32 MiB) default scoped-VMEM limits.
    out_row = pl.pallas_call(
        kernel,
        out_shape=jax.ShapeDtypeStruct((1, p_ext), f32),
        in_specs=[pl.BlockSpec(memory_space=vmem)] * 2,
        out_specs=pl.BlockSpec(memory_space=vmem),
    )(xp_t, wcg)

    # Valid outputs live at lanes [s_max, s_max + p_out).  Positions inside each padded
    # image with i >= h or j >= w are garbage (their taps wrap across row / image
    # boundaries) and MUST be dropped by the [:, :h, :w] slice below.
    data = out_row[0, s_max:s_max + p_out].reshape(n, h_pad, w_pad)[:, :h, :w]

    # ---- input-independent bias field (kept out of the kernel hot path) ----
    # bias(i,j) = b2 + sum_{kh,kw} (W2[:,kh,kw]·b1) * interior(i+kh, j+kw)
    # (the conv1 bias only exists at interior positions of the zero-padded x1).
    bc = jnp.matmul(w2t, b1.astype(f32), precision=highest).reshape(fh, fw)
    interior = jnp.zeros((h_pad, w_pad), f32).at[rh:rh + h, rw:rw + w].set(1.0)
    bias2d = jnp.zeros((h, w), f32)
    for kh in range(fh):
        for kw in range(fw):
            bias2d = bias2d + bc[kh, kw] * interior[kh:kh + h, kw:kw + w]
    bias2d = bias2d + b2.astype(f32)[0]

    return (data + bias2d[None]).reshape(n, 1, h, w)


def init_cfconv1_params(key, *, target_sz, in_num_channels, out_num_channels):
    """Mirror CFConv1Net.__init__ / weight_init (same distributions, JAX RNG)."""
    rw = int(np.ceil(target_sz[0] / 2))
    rh = int(np.ceil(target_sz[1] / 2))
    fw, fh = 2 * rw + 1, 2 * rh + 1
    k1, k2 = jax.random.split(key)
    w1 = jax.random.normal(k1, (out_num_channels, in_num_channels, 1, 1), jnp.float32)
    w1 = w1 / np.sqrt(in_num_channels) / 1e5
    b1 = jnp.zeros((out_num_channels,), jnp.float32)
    w2 = jax.random.normal(k2, (1, out_num_channels, fh, fw), jnp.float32)
    w2 = w2 / np.sqrt(out_num_channels * rh * rw) / 1e5
    b2 = jnp.zeros((1,), jnp.float32)
    return dict(w1=w1, b1=b1, w2=w2, b2=b2, rh=rh, rw=rw)


def _reference_forward(x, w1, b1, w2, b2, rh, rw):
    """float64 numpy reference of the PyTorch forward (cross-correlation)."""
    x = np.asarray(x, np.float64)
    w1 = np.asarray(w1, np.float64)
    b1 = np.asarray(b1, np.float64)
    w2 = np.asarray(w2, np.float64)
    b2 = np.asarray(b2, np.float64)
    x1 = np.einsum("ncij,oc->noij", x, w1[:, :, 0, 0]) + b1[None, :, None, None]
    n, _, h, w = x1.shape
    fh, fw = w2.shape[2], w2.shape[3]
    x1p = np.pad(x1, ((0, 0), (0, 0), (rh, rh), (rw, rw)))
    out = np.zeros((n, 1, h, w), np.float64)
    for kh in range(fh):
        for kw in range(fw):
            out[:, 0] += np.einsum("ncij,c->nij",
                                   x1p[:, :, kh:kh + h, kw:kw + w], w2[0, :, kh, kw])
    out += b2[0]
    return out


if __name__ == "__main__":
    key = jax.random.PRNGKey(0)
    kx, kp, kb1, kb2 = jax.random.split(key, 4)

    # CFConv1Net(target_sz=(5, 5), in_num_channels=4, out_num_channels=32)
    #   -> rh = rw = 3, cf kernel = 7x7, padding (3, 3) (same-size output)
    params = init_cfconv1_params(kp, target_sz=(5, 5),
                                 in_num_channels=4, out_num_channels=32)
    # mimic copy_meta_weights() loading non-zero biases so the bias path is exercised
    params["b1"] = jax.random.normal(kb1, params["b1"].shape, jnp.float32) * 1e-5
    params["b2"] = jax.random.normal(kb2, params["b2"].shape, jnp.float32) * 1e-10

    x = jax.random.normal(kx, (2, 4, 16, 16), dtype=jnp.float32)   # NCHW

    out = cfconv1_forward(x, params["w1"], params["b1"], params["w2"], params["b2"],
                          rh=params["rh"], rw=params["rw"])
    jax.block_until_ready(out)

    ref = _reference_forward(x, params["w1"], params["b1"], params["w2"], params["b2"],
                             params["rh"], params["rw"])
    scale = float(np.max(np.abs(ref)))
    np.testing.assert_allclose(np.asarray(out), ref, rtol=1e-4, atol=1e-4 * scale)
    print("KERNEL_OK")
</pallas_src>

<mosaic_0001>
module attributes {stable_mosaic.version = 11 : i64} {
  func.func @_cfconv1_kernel(%arg0: memref<4x1152xf32, #tpu.memory_space<vmem>>, %arg1: memref<56x4xf32, #tpu.memory_space<vmem>>, %arg2: memref<1x1152xf32, #tpu.memory_space<vmem>>) attributes {dimension_semantics = [], scalar_prefetch = 0 : i64, scratch_operands = 0 : i64, tpu.core_type = #tpu.core_type<tc>} {
    %c0 = arith.constant 0 : index
    %c0_0 = arith.constant 0 : index
    %0 = vector.load %arg0[%c0, %c0_0] : memref<4x1152xf32, #tpu.memory_space<vmem>>, vector<4x1152xf32>
    %c0_1 = arith.constant 0 : index
    %c0_2 = arith.constant 0 : index
    %1 = vector.load %arg1[%c0_1, %c0_2] : memref<56x4xf32, #tpu.memory_space<vmem>>, vector<56x4xf32>
    %2 = vector.extract_strided_slice %1 {offsets = [0, 0], sizes = [8, 4], strides = [1, 1]} : vector<56x4xf32> to vector<8x4xf32>
    %3 = vector.extract_strided_slice %2 {offsets = [0, 0], sizes = [8, 1], strides = [1, 1]} : vector<8x4xf32> to vector<8x1xf32>
    %4 = vector.extract_strided_slice %0 {offsets = [0, 0], sizes = [1, 1152], strides = [1, 1]} : vector<4x1152xf32> to vector<1x1152xf32>
    %5 = vector.broadcast %3 : vector<8x1xf32> to vector<8x1152xf32>
    %6 = vector.broadcast %4 : vector<1x1152xf32> to vector<8x1152xf32>
    %7 = arith.mulf %5, %6 : vector<8x1152xf32>
    %8 = vector.extract_strided_slice %2 {offsets = [0, 1], sizes = [8, 1], strides = [1, 1]} : vector<8x4xf32> to vector<8x1xf32>
    %9 = vector.extract_strided_slice %0 {offsets = [1, 0], sizes = [1, 1152], strides = [1, 1]} : vector<4x1152xf32> to vector<1x1152xf32>
    %10 = vector.broadcast %8 : vector<8x1xf32> to vector<8x1152xf32>
    %11 = vector.broadcast %9 : vector<1x1152xf32> to vector<8x1152xf32>
    %12 = arith.mulf %10, %11 : vector<8x1152xf32>
    %13 = arith.addf %7, %12 : vector<8x1152xf32>
    %14 = vector.extract_strided_slice %2 {offsets = [0, 2], sizes = [8, 1], strides = [1, 1]} : vector<8x4xf32> to vector<8x1xf32>
    %15 = vector.extract_strided_slice %0 {offsets = [2, 0], sizes = [1, 1152], strides = [1, 1]} : vector<4x1152xf32> to vector<1x1152xf32>
    %16 = vector.broadcast %14 : vector<8x1xf32> to vector<8x1152xf32>
    %17 = vector.broadcast %15 : vector<1x1152xf32> to vector<8x1152xf32>
    %18 = arith.mulf %16, %17 : vector<8x1152xf32>
    %19 = arith.addf %13, %18 : vector<8x1152xf32>
    %20 = vector.extract_strided_slice %2 {offsets = [0, 3], sizes = [8, 1], strides = [1, 1]} : vector<8x4xf32> to vector<8x1xf32>
    %21 = vector.extract_strided_slice %0 {offsets = [3, 0], sizes = [1, 1152], strides = [1, 1]} : vector<4x1152xf32> to vector<1x1152xf32>
    %22 = vector.broadcast %20 : vector<8x1xf32> to vector<8x1152xf32>
    %23 = vector.broadcast %21 : vector<1x1152xf32> to vector<8x1152xf32>
    %24 = arith.mulf %22, %23 : vector<8x1152xf32>
    %25 = arith.addf %19, %24 : vector<8x1152xf32>
    %c132_i32 = arith.constant 132 : i32
    %26 = tpu.dynamic_rotate %25 by %c132_i32 dim 1 {stride = 1 : si32, stride_dimension = 0 : si32} : vector<8x1152xf32>, i32 -> vector<8x1152xf32>
    %27 = vector.extract_strided_slice %1 {offsets = [8, 0], sizes = [8, 4], strides = [1, 1]} : vector<56x4xf32> to vector<8x4xf32>
    %28 = vector.extract_strided_slice %27 {offsets = [0, 0], sizes = [8, 1], strides = [1, 1]} : vector<8x4xf32> to vector<8x1xf32>
    %29 = vector.extract_strided_slice %0 {offsets = [0, 0], sizes = [1, 1152], strides = [1, 1]} : vector<4x1152xf32> to vector<1x1152xf32>
    %30 = vector.broadcast %28 : vector<8x1xf32> to vector<8x1152xf32>
    %31 = vector.broadcast %29 : vector<1x1152xf32> to vector<8x1152xf32>
    %32 = arith.mulf %30, %31 : vector<8x1152xf32>
    %33 = vector.extract_strided_slice %27 {offsets = [0, 1], sizes = [8, 1], strides = [1, 1]} : vector<8x4xf32> to vector<8x1xf32>
    %34 = vector.extract_strided_slice %0 {offsets = [1, 0], sizes = [1, 1152], strides = [1, 1]} : vector<4x1152xf32> to vector<1x1152xf32>
    %35 = vector.broadcast %33 : vector<8x1xf32> to vector<8x1152xf32>
    %36 = vector.broadcast %34 : vector<1x1152xf32> to vector<8x1152xf32>
    %37 = arith.mulf %35, %36 : vector<8x1152xf32>
    %38 = arith.addf %32, %37 : vector<8x1152xf32>
    %39 = vector.extract_strided_slice %27 {offsets = [0, 2], sizes = [8, 1], strides = [1, 1]} : vector<8x4xf32> to vector<8x1xf32>
    %40 = vector.extract_strided_slice %0 {offsets = [2, 0], sizes = [1, 1152], strides = [1, 1]} : vector<4x1152xf32> to vector<1x1152xf32>
    %41 = vector.broadcast %39 : vector<8x1xf32> to vector<8x1152xf32>
    %42 = vector.broadcast %40 : vector<1x1152xf32> to vector<8x1152xf32>
    %43 = arith.mulf %41, %42 : vector<8x1152xf32>
    %44 = arith.addf %38, %43 : vector<8x1152xf32>
    %45 = vector.extract_strided_slice %27 {offsets = [0, 3], sizes = [8, 1], strides = [1, 1]} : vector<8x4xf32> to vector<8x1xf32>
    %46 = vector.extract_strided_slice %0 {offsets = [3, 0], sizes = [1, 1152], strides = [1, 1]} : vector<4x1152xf32> to vector<1x1152xf32>
    %47 = vector.broadcast %45 : vector<8x1xf32> to vector<8x1152xf32>
    %48 = vector.broadcast %46 : vector<1x1152xf32> to vector<8x1152xf32>
    %49 = arith.mulf %47, %48 : vector<8x1152xf32>
    %50 = arith.addf %44, %49 : vector<8x1152xf32>
    %c110_i32 = arith.constant 110 : i32
    %51 = tpu.dynamic_rotate %50 by %c110_i32 dim 1 {stride = 1 : si32, stride_dimension = 0 : si32} : vector<8x1152xf32>, i32 -> vector<8x1152xf32>
    %52 = arith.addf %26, %51 : vector<8x1152xf32>
    %53 = vector.extract_strided_slice %1 {offsets = [16, 0], sizes = [8, 4], strides = [1, 1]} : vector<56x4xf32> to vector<8x4xf32>
    %54 = vector.extract_strided_slice %53 {offsets = [0, 0], sizes = [8, 1], strides = [1, 1]} : vector<8x4xf32> to vector<8x1xf32>
    %55 = vector.extract_strided_slice %0 {offsets = [0, 0], sizes = [1, 1152], strides = [1, 1]} : vector<4x1152xf32> to vector<1x1152xf32>
    %56 = vector.broadcast %54 : vector<8x1xf32> to vector<8x1152xf32>
    %57 = vector.broadcast %55 : vector<1x1152xf32> to vector<8x1152xf32>
    %58 = arith.mulf %56, %57 : vector<8x1152xf32>
    %59 = vector.extract_strided_slice %53 {offsets = [0, 1], sizes = [8, 1], strides = [1, 1]} : vector<8x4xf32> to vector<8x1xf32>
    %60 = vector.extract_strided_slice %0 {offsets = [1, 0], sizes = [1, 1152], strides = [1, 1]} : vector<4x1152xf32> to vector<1x1152xf32>
    %61 = vector.broadcast %59 : vector<8x1xf32> to vector<8x1152xf32>
    %62 = vector.broadcast %60 : vector<1x1152xf32> to vector<8x1152xf32>
    %63 = arith.mulf %61, %62 : vector<8x1152xf32>
    %64 = arith.addf %58, %63 : vector<8x1152xf32>
    %65 = vector.extract_strided_slice %53 {offsets = [0, 2], sizes = [8, 1], strides = [1, 1]} : vector<8x4xf32> to vector<8x1xf32>
    %66 = vector.extract_strided_slice %0 {offsets = [2, 0], sizes = [1, 1152], strides = [1, 1]} : vector<4x1152xf32> to vector<1x1152xf32>
    %67 = vector.broadcast %65 : vector<8x1xf32> to vector<8x1152xf32>
    %68 = vector.broadcast %66 : vector<1x1152xf32> to vector<8x1152xf32>
    %69 = arith.mulf %67, %68 : vector<8x1152xf32>
    %70 = arith.addf %64, %69 : vector<8x1152xf32>
    %71 = vector.extract_strided_slice %53 {offsets = [0, 3], sizes = [8, 1], strides = [1, 1]} : vector<8x4xf32> to vector<8x1xf32>
    %72 = vector.extract_strided_slice %0 {offsets = [3, 0], sizes = [1, 1152], strides = [1, 1]} : vector<4x1152xf32> to vector<1x1152xf32>
    %73 = vector.broadcast %71 : vector<8x1xf32> to vector<8x1152xf32>
    %74 = vector.broadcast %72 : vector<1x1152xf32> to vector<8x1152xf32>
    %75 = arith.mulf %73, %74 : vector<8x1152xf32>
    %76 = arith.addf %70, %75 : vector<8x1152xf32>
    %c88_i32 = arith.constant 88 : i32
    %77 = tpu.dynamic_rotate %76 by %c88_i32 dim 1 {stride = 1 : si32, stride_dimension = 0 : si32} : vector<8x1152xf32>, i32 -> vector<8x1152xf32>
    %78 = arith.addf %52, %77 : vector<8x1152xf32>
    %79 = vector.extract_strided_slice %1 {offsets = [24, 0], sizes = [8, 4], strides = [1, 1]} : vector<56x4xf32> to vector<8x4xf32>
    %80 = vector.extract_strided_slice %79 {offsets = [0, 0], sizes = [8, 1], strides = [1, 1]} : vector<8x4xf32> to vector<8x1xf32>
    %81 = vector.extract_strided_slice %0 {offsets = [0, 0], sizes = [1, 1152], strides = [1, 1]} : vector<4x1152xf32> to vector<1x1152xf32>
    %82 = vector.broadcast %80 : vector<8x1xf32> to vector<8x1152xf32>
    %83 = vector.broadcast %81 : vector<1x1152xf32> to vector<8x1152xf32>
    %84 = arith.mulf %82, %83 : vector<8x1152xf32>
    %85 = vector.extract_strided_slice %79 {offsets = [0, 1], sizes = [8, 1], strides = [1, 1]} : vector<8x4xf32> to vector<8x1xf32>
    %86 = vector.extract_strided_slice %0 {offsets = [1, 0], sizes = [1, 1152], strides = [1, 1]} : vector<4x1152xf32> to vector<1x1152xf32>
    %87 = vector.broadcast %85 : vector<8x1xf32> to vector<8x1152xf32>
    %88 = vector.broadcast %86 : vector<1x1152xf32> to vector<8x1152xf32>
    %89 = arith.mulf %87, %88 : vector<8x1152xf32>
    %90 = arith.addf %84, %89 : vector<8x1152xf32>
    %91 = vector.extract_strided_slice %79 {offsets = [0, 2], sizes = [8, 1], strides = [1, 1]} : vector<8x4xf32> to vector<8x1xf32>
    %92 = vector.extract_strided_slice %0 {offsets = [2, 0], sizes = [1, 1152], strides = [1, 1]} : vector<4x1152xf32> to vector<1x1152xf32>
    %93 = vector.broadcast %91 : vector<8x1xf32> to vector<8x1152xf32>
    %94 = vector.broadcast %92 : vector<1x1152xf32> to vector<8x1152xf32>
    %95 = arith.mulf %93, %94 : vector<8x1152xf32>
    %96 = arith.addf %90, %95 : vector<8x1152xf32>
    %97 = vector.extract_strided_slice %79 {offsets = [0, 3], sizes = [8, 1], strides = [1, 1]} : vector<8x4xf32> to vector<8x1xf32>
    %98 = vector.extract_strided_slice %0 {offsets = [3, 0], sizes = [1, 1152], strides = [1, 1]} : vector<4x1152xf32> to vector<1x1152xf32>
    %99 = vector.broadcast %97 : vector<8x1xf32> to vector<8x1152xf32>
    %100 = vector.broadcast %98 : vector<1x1152xf32> to vector<8x1152xf32>
    %101 = arith.mulf %99, %100 : vector<8x1152xf32>
    %102 = arith.addf %96, %101 : vector<8x1152xf32>
    %c66_i32 = arith.constant 66 : i32
    %103 = tpu.dynamic_rotate %102 by %c66_i32 dim 1 {stride = 1 : si32, stride_dimension = 0 : si32} : vector<8x1152xf32>, i32 -> vector<8x1152xf32>
    %104 = arith.addf %78, %103 : vector<8x1152xf32>
    %105 = vector.extract_strided_slice %1 {offsets = [32, 0], sizes = [8, 4], strides = [1, 1]} : vector<56x4xf32> to vector<8x4xf32>
    %106 = vector.extract_strided_slice %105 {offsets = [0, 0], sizes = [8, 1], strides = [1, 1]} : vector<8x4xf32> to vector<8x1xf32>
    %107 = vector.extract_strided_slice %0 {offsets = [0, 0], sizes = [1, 1152], strides = [1, 1]} : vector<4x1152xf32> to vector<1x1152xf32>
    %108 = vector.broadcast %106 : vector<8x1xf32> to vector<8x1152xf32>
    %109 = vector.broadcast %107 : vector<1x1152xf32> to vector<8x1152xf32>
    %110 = arith.mulf %108, %109 : vector<8x1152xf32>
    %111 = vector.extract_strided_slice %105 {offsets = [0, 1], sizes = [8, 1], strides = [1, 1]} : vector<8x4xf32> to vector<8x1xf32>
    %112 = vector.extract_strided_slice %0 {offsets = [1, 0], sizes = [1, 1152], strides = [1, 1]} : vector<4x1152xf32> to vector<1x1152xf32>
    %113 = vector.broadcast %111 : vector<8x1xf32> to vector<8x1152xf32>
    %114 = vector.broadcast %112 : vector<1x1152xf32> to vector<8x1152xf32>
    %115 = arith.mulf %113, %114 : vector<8x1152xf32>
    %116 = arith.addf %110, %115 : vector<8x1152xf32>
    %117 = vector.extract_strided_slice %105 {offsets = [0, 2], sizes = [8, 1], strides = [1, 1]} : vector<8x4xf32> to vector<8x1xf32>
    %118 = vector.extract_strided_slice %0 {offsets = [2, 0], sizes = [1, 1152], strides = [1, 1]} : vector<4x1152xf32> to vector<1x1152xf32>
    %119 = vector.broadcast %117 : vector<8x1xf32> to vector<8x1152xf32>
    %120 = vector.broadcast %118 : vector<1x1152xf32> to vector<8x1152xf32>
    %121 = arith.mulf %119, %120 : vector<8x1152xf32>
    %122 = arith.addf %116, %121 : vector<8x1152xf32>
    %123 = vector.extract_strided_slice %105 {offsets = [0, 3], sizes = [8, 1], strides = [1, 1]} : vector<8x4xf32> to vector<8x1xf32>
    %124 = vector.extract_strided_slice %0 {offsets = [3, 0], sizes = [1, 1152], strides = [1, 1]} : vector<4x1152xf32> to vector<1x1152xf32>
    %125 = vector.broadcast %123 : vector<8x1xf32> to vector<8x1152xf32>
    %126 = vector.broadcast %124 : vector<1x1152xf32> to vector<8x1152xf32>
    %127 = arith.mulf %125, %126 : vector<8x1152xf32>
    %128 = arith.addf %122, %127 : vector<8x1152xf32>
    %c44_i32 = arith.constant 44 : i32
    %129 = tpu.dynamic_rotate %128 by %c44_i32 dim 1 {stride = 1 : si32, stride_dimension = 0 : si32} : vector<8x1152xf32>, i32 -> vector<8x1152xf32>
    %130 = arith.addf %104, %129 : vector<8x1152xf32>
    %131 = vector.extract_strided_slice %1 {offsets = [40, 0], sizes = [8, 4], strides = [1, 1]} : vector<56x4xf32> to vector<8x4xf32>
    %132 = vector.extract_strided_slice %131 {offsets = [0, 0], sizes = [8, 1], strides = [1, 1]} : vector<8x4xf32> to vector<8x1xf32>
    %133 = vector.extract_strided_slice %0 {offsets = [0, 0], sizes = [1, 1152], strides = [1, 1]} : vector<4x1152xf32> to vector<1x1152xf32>
    %134 = vector.broadcast %132 : vector<8x1xf32> to vector<8x1152xf32>
    %135 = vector.broadcast %133 : vector<1x1152xf32> to vector<8x1152xf32>
    %136 = arith.mulf %134, %135 : vector<8x1152xf32>
    %137 = vector.extract_strided_slice %131 {offsets = [0, 1], sizes = [8, 1], strides = [1, 1]} : vector<8x4xf32> to vector<8x1xf32>
    %138 = vector.extract_strided_slice %0 {offsets = [1, 0], sizes = [1, 1152], strides = [1, 1]} : vector<4x1152xf32> to vector<1x1152xf32>
    %139 = vector.broadcast %137 : vector<8x1xf32> to vector<8x1152xf32>
    %140 = vector.broadcast %138 : vector<1x1152xf32> to vector<8x1152xf32>
    %141 = arith.mulf %139, %140 : vector<8x1152xf32>
    %142 = arith.addf %136, %141 : vector<8x1152xf32>
    %143 = vector.extract_strided_slice %131 {offsets = [0, 2], sizes = [8, 1], strides = [1, 1]} : vector<8x4xf32> to vector<8x1xf32>
    %144 = vector.extract_strided_slice %0 {offsets = [2, 0], sizes = [1, 1152], strides = [1, 1]} : vector<4x1152xf32> to vector<1x1152xf32>
    %145 = vector.broadcast %143 : vector<8x1xf32> to vector<8x1152xf32>
    %146 = vector.broadcast %144 : vector<1x1152xf32> to vector<8x1152xf32>
    %147 = arith.mulf %145, %146 : vector<8x1152xf32>
    %148 = arith.addf %142, %147 : vector<8x1152xf32>
    %149 = vector.extract_strided_slice %131 {offsets = [0, 3], sizes = [8, 1], strides = [1, 1]} : vector<8x4xf32> to vector<8x1xf32>
    %150 = vector.extract_strided_slice %0 {offsets = [3, 0], sizes = [1, 1152], strides = [1, 1]} : vector<4x1152xf32> to vector<1x1152xf32>
    %151 = vector.broadcast %149 : vector<8x1xf32> to vector<8x1152xf32>
    %152 = vector.broadcast %150 : vector<1x1152xf32> to vector<8x1152xf32>
    %153 = arith.mulf %151, %152 : vector<8x1152xf32>
    %154 = arith.addf %148, %153 : vector<8x1152xf32>
    %c22_i32 = arith.constant 22 : i32
    %155 = tpu.dynamic_rotate %154 by %c22_i32 dim 1 {stride = 1 : si32, stride_dimension = 0 : si32} : vector<8x1152xf32>, i32 -> vector<8x1152xf32>
    %156 = arith.addf %130, %155 : vector<8x1152xf32>
    %157 = vector.extract_strided_slice %1 {offsets = [48, 0], sizes = [8, 4], strides = [1, 1]} : vector<56x4xf32> to vector<8x4xf32>
    %158 = vector.extract_strided_slice %157 {offsets = [0, 0], sizes = [8, 1], strides = [1, 1]} : vector<8x4xf32> to vector<8x1xf32>
    %159 = vector.extract_strided_slice %0 {offsets = [0, 0], sizes = [1, 1152], strides = [1, 1]} : vector<4x1152xf32> to vector<1x1152xf32>
    %160 = vector.broadcast %158 : vector<8x1xf32> to vector<8x1152xf32>
    %161 = vector.broadcast %159 : vector<1x1152xf32> to vector<8x1152xf32>
    %162 = arith.mulf %160, %161 : vector<8x1152xf32>
    %163 = vector.extract_strided_slice %157 {offsets = [0, 1], sizes = [8, 1], strides = [1, 1]} : vector<8x4xf32> to vector<8x1xf32>
    %164 = vector.extract_strided_slice %0 {offsets = [1, 0], sizes = [1, 1152], strides = [1, 1]} : vector<4x1152xf32> to vector<1x1152xf32>
    %165 = vector.broadcast %163 : vector<8x1xf32> to vector<8x1152xf32>
    %166 = vector.broadcast %164 : vector<1x1152xf32> to vector<8x1152xf32>
    %167 = arith.mulf %165, %166 : vector<8x1152xf32>
    %168 = arith.addf %162, %167 : vector<8x1152xf32>
    %169 = vector.extract_strided_slice %157 {offsets = [0, 2], sizes = [8, 1], strides = [1, 1]} : vector<8x4xf32> to vector<8x1xf32>
    %170 = vector.extract_strided_slice %0 {offsets = [2, 0], sizes = [1, 1152], strides = [1, 1]} : vector<4x1152xf32> to vector<1x1152xf32>
    %171 = vector.broadcast %169 : vector<8x1xf32> to vector<8x1152xf32>
    %172 = vector.broadcast %170 : vector<1x1152xf32> to vector<8x1152xf32>
    %173 = arith.mulf %171, %172 : vector<8x1152xf32>
    %174 = arith.addf %168, %173 : vector<8x1152xf32>
    %175 = vector.extract_strided_slice %157 {offsets = [0, 3], sizes = [8, 1], strides = [1, 1]} : vector<8x4xf32> to vector<8x1xf32>
    %176 = vector.extract_strided_slice %0 {offsets = [3, 0], sizes = [1, 1152], strides = [1, 1]} : vector<4x1152xf32> to vector<1x1152xf32>
    %177 = vector.broadcast %175 : vector<8x1xf32> to vector<8x1152xf32>
    %178 = vector.broadcast %176 : vector<1x1152xf32> to vector<8x1152xf32>
    %179 = arith.mulf %177, %178 : vector<8x1152xf32>
    %180 = arith.addf %174, %179 : vector<8x1152xf32>
    %c0_i32 = arith.constant 0 : i32
    %181 = tpu.dynamic_rotate %180 by %c0_i32 dim 1 {stride = 1 : si32, stride_dimension = 0 : si32} : vector<8x1152xf32>, i32 -> vector<8x1152xf32>
    %182 = arith.addf %156, %181 : vector<8x1152xf32>
    %cst = arith.constant dense<0.000000e+00> : vector<1152xf32>
    %183 = vector.multi_reduction <add>, %182, %cst [0] : vector<8x1152xf32> to vector<1152xf32>
    %184 = vector.shape_cast %183 : vector<1152xf32> to vector<1x1152xf32>
    %c0_3 = arith.constant 0 : index
    %c0_4 = arith.constant 0 : index
    %185 = vector.load %arg2[%c0_3, %c0_4] : memref<1x1152xf32, #tpu.memory_space<vmem>>, vector<1x1152xf32>
    tpu.vector_store %arg2[%c0_3, %c0_4], %184 {strides = array<i32>} : memref<1x1152xf32, #tpu.memory_space<vmem>>, vector<1x1152xf32>,
    return
  }
}

</mosaic_0001>

<llo_original>
// kernel: squeeze.51
$region0: #{squeeze.51}
  %s0 = inlined_call_operand.vmem [shape: f32[968], index: 0, kind: input, shape index: {}]
  %s1 = inlined_call_operand.vmem [shape: f32[2,22,22], index: 1, kind: output, shape index: {}]
  %v2 = vld [vmem:[%s0] sm:$0x1]
  %vm3 = vcmask 179200
  %4 = vst.msk [vmem:[%s1] sm:$0x1] %vm3, %v2
  %s5 = scalar_lea.vmem %s0, 6
  %v6 = vld [vmem:[%s5] sm:$0x1]
  %7 = vrot.lane.b32.xlu0 %v6, 126
  %v8 = vpop.permute.xlu0 %7
  %vm9 = vcmask 179200
  %s10 = scalar_lea.vmem %s1, 37
  %11 = vst.msk [vmem:[%s10] sm:$0x1] %vm9, %v8
  %s12 = scalar_lea.vmem %s0, 1
  %v13 = vld [vmem:[%s12] sm:$0x1]
  %14 = vrot.lane.b32.xlu0 %v13, 124
  %v15 = vpop.permute.xlu0 %14
  %vm16 = vcmask 179200
  %s17 = scalar_lea.vmem %s1, 6
  %18 = vst.msk [vmem:[%s17] sm:$0x1] %vm16, %v15
  %s19 = scalar_lea.vmem %s0, 7
  %v20 = vld [vmem:[%s19] sm:$0x1]
  %21 = vrot.lane.b32.xlu0 %v20, 122
  %v22 = vpop.permute.xlu0 %21
  %vm23 = vcmask 179200
  %s24 = scalar_lea.vmem %s1, 43
  %25 = vst.msk [vmem:[%s24] sm:$0x1] %vm23, %v22
  %s26 = scalar_lea.vmem %s0, 2
  %v27 = vld [vmem:[%s26] sm:$0x1]
  %28 = vrot.lane.b32.xlu0 %v27, 120
  %v29 = vpop.permute.xlu0 %28
  %vm30 = vcmask 179200
  %s31 = scalar_lea.vmem %s1, 12
  %32 = vst.msk [vmem:[%s31] sm:$0x1] %vm30, %v29
  %s33 = scalar_lea.vmem %s0, 3
  %v34 = vld [vmem:[%s33] sm:$0x1]
  %35 = vrot.lane.b32.xlu0 %v34, 116
  %v36 = vpop.permute.xlu0 %35
  %vm37 = vcmask 179200
  %s38 = scalar_lea.vmem %s1, 18
  %39 = vst.msk [vmem:[%s38] sm:$0x1] %vm37, %v36
  %s40 = scalar_lea.vmem %s0, 4
  %v41 = vld [vmem:[%s40] sm:$0x1]
  %42 = vrot.lane.b32.xlu0 %v41, 112
  %v43 = vpop.permute.xlu0 %42
  %vm44 = vcmask 179200
  %s45 = scalar_lea.vmem %s1, 26
  %46 = vst.msk [vmem:[%s45] sm:$0x1] %vm44, %v43
  %s47 = scalar_lea.vmem %s0, 5
  %v48 = vld [vmem:[%s47] sm:$0x1]
  %49 = vrot.lane.b32.xlu0 %v48, 108
  %v50 = vpop.permute.xlu0 %49
  %vm51 = vcmask 179200
  %s52 = scalar_lea.vmem %s1, 32
  %53 = vst.msk [vmem:[%s52] sm:$0x1] %vm51, %v50
  %v54 = vld [vmem:[%s0] sm:$0x1]
  %55 = vrot.lane.b32.xlu0 %v54, 106
  %v56 = vpop.permute.xlu0 %55
  %vm57 = vcmask 179200
  %s58 = scalar_lea.vmem %s1, 1
  %59 = vst.msk [vmem:[%s58] sm:$0x1] %vm57, %v56
  %s60 = scalar_lea.vmem %s0, 6
  %v61 = vld [vmem:[%s60] sm:$0x1]
  %62 = vrot.lane.b32.xlu0 %v61, 104
  %v63 = vpop.permute.xlu0 %62
  %vm64 = vcmask 179200
  %s65 = scalar_lea.vmem %s1, 38
  %66 = vst.msk [vmem:[%s65] sm:$0x1] %vm64, %v63
  %s67 = scalar_lea.vmem %s0, 1
  %v68 = vld [vmem:[%s67] sm:$0x1]
  %69 = vrot.lane.b32.xlu0 %v68, 102
  %v70 = vpop.permute.xlu0 %69
  %vm71 = vcmask 179200
  %s72 = scalar_lea.vmem %s1, 7
  %73 = vst.msk [vmem:[%s72] sm:$0x1] %vm71, %v70
  %s74 = scalar_lea.vmem %s0, 7
  %v75 = vld [vmem:[%s74] sm:$0x1]
  %76 = vrot.lane.b32.xlu0 %v75, 100
  %v77 = vpop.permute.xlu0 %76
  %vm78 = vcmask 179200
  %s79 = scalar_lea.vmem %s1, 44
  %80 = vst.msk [vmem:[%s79] sm:$0x1] %vm78, %v77
  %s81 = scalar_lea.vmem %s0, 2
  %v82 = vld [vmem:[%s81] sm:$0x1]
  %83 = vrot.lane.b32.xlu0 %v82, 98
  %v84 = vpop.permute.xlu0 %83
  %vm85 = vcmask 179200
  %s86 = scalar_lea.vmem %s1, 13
  %87 = vst.msk [vmem:[%s86] sm:$0x1] %vm85, %v84
  %s88 = scalar_lea.vmem %s0, 3
  %v89 = vld [vmem:[%s88] sm:$0x1]
  %90 = vrot.lane.b32.xlu0 %v89, 94
  %v91 = vpop.permute.xlu0 %90
  %vm92 = vcmask 179200
  %s93 = scalar_lea.vmem %s1, 19
  %94 = vst.msk [vmem:[%s93] sm:$0x1] %vm92, %v91
  %s95 = scalar_lea.vmem %s0, 4
  %v96 = vld [vmem:[%s95] sm:$0x1]
  %97 = vrot.lane.b32.xlu0 %v96, 90
  %v98 = vpop.permute.xlu0 %97
  %vm99 = vcmask 179200
  %s100 = scalar_lea.vmem %s1, 27
  %101 = vst.msk [vmem:[%s100] sm:$0x1] %vm99, %v98
  %s102 = scalar_lea.vmem %s0, 5
  %v103 = vld [vmem:[%s102] sm:$0x1]
  %104 = vrot.lane.b32.xlu0 %v103, 86
  %v105 = vpop.permute.xlu0 %104
  %vm106 = vcmask 179200
  %s107 = scalar_lea.vmem %s1, 33
  %108 = vst.msk [vmem:[%s107] sm:$0x1] %vm106, %v105
  %v109 = vld [vmem:[%s0] sm:$0x1]
  %110 = vrot.lane.b32.xlu0 %v109, 84
  %v111 = vpop.permute.xlu0 %110
  %vm112 = vcmask 179200
  %s113 = scalar_lea.vmem %s1, 2
  %114 = vst.msk [vmem:[%s113] sm:$0x1] %vm112, %v111
  %s115 = scalar_lea.vmem %s0, 6
  %v116 = vld [vmem:[%s115] sm:$0x1]
  %117 = vrot.lane.b32.xlu0 %v116, 82
  %v118 = vpop.permute.xlu0 %117
  %vm119 = vcmask 179200
  %s120 = scalar_lea.vmem %s1, 39
  %121 = vst.msk [vmem:[%s120] sm:$0x1] %vm119, %v118
  %s122 = scalar_lea.vmem %s0, 1
  %v123 = vld [vmem:[%s122] sm:$0x1]
  %124 = vrot.lane.b32.xlu0 %v123, 80
  %v125 = vpop.permute.xlu0 %124
  %vm126 = vcmask 179200
  %s127 = scalar_lea.vmem %s1, 8
  %128 = vst.msk [vmem:[%s127] sm:$0x1] %vm126, %v125
  %s129 = scalar_lea.vmem %s0, 7
  %v130 = vld [vmem:[%s129] sm:$0x1]
  %131 = vrot.lane.b32.xlu0 %v130, 78
  %v132 = vpop.permute.xlu0 %131
  %vm133 = vcmask 179200
  %s134 = scalar_lea.vmem %s1, 45
  %135 = vst.msk [vmem:[%s134] sm:$0x1] %vm133, %v132
  %s136 = scalar_lea.vmem %s0, 2
  %v137 = vld [vmem:[%s136] sm:$0x1]
  %138 = vrot.lane.b32.xlu0 %v137, 76
  %v139 = vpop.permute.xlu0 %138
  %vm140 = vcmask 179200
  %s141 = scalar_lea.vmem %s1, 14
  %142 = vst.msk [vmem:[%s141] sm:$0x1] %vm140, %v139
  %s143 = scalar_lea.vmem %s0, 3
  %v144 = vld [vmem:[%s143] sm:$0x1]
  %145 = vrot.lane.b32.xlu0 %v144, 72
  %v146 = vpop.permute.xlu0 %145
  %vm147 = vcmask 179200
  %s148 = scalar_lea.vmem %s1, 20
  %149 = vst.msk [vmem:[%s148] sm:$0x1] %vm147, %v146
  %s150 = scalar_lea.vmem %s0, 4
  %v151 = vld [vmem:[%s150] sm:$0x1]
  %152 = vrot.lane.b32.xlu0 %v151, 68
  %v153 = vpop.permute.xlu0 %152
  %vm154 = vcmask 179200
  %s155 = scalar_lea.vmem %s1, 28
  %156 = vst.msk [vmem:[%s155] sm:$0x1] %vm154, %v153
  %s157 = scalar_lea.vmem %s0, 5
  %v158 = vld [vmem:[%s157] sm:$0x1]
  %159 = vrot.lane.b32.xlu0 %v158, 64
  %v160 = vpop.permute.xlu0 %159
  %vm161 = vcmask 179200
  %s162 = scalar_lea.vmem %s1, 34
  %163 = vst.msk [vmem:[%s162] sm:$0x1] %vm161, %v160
  %v164 = vld [vmem:[%s0] sm:$0x1]
  %165 = vrot.lane.b32.xlu0 %v164, 62
  %v166 = vpop.permute.xlu0 %165
  %vm167 = vcmask 179200
  %s168 = scalar_lea.vmem %s1, 3
  %169 = vst.msk [vmem:[%s168] sm:$0x1] %vm167, %v166
  %s170 = scalar_lea.vmem %s0, 6
  %v171 = vld [vmem:[%s170] sm:$0x1]
  %172 = vrot.lane.b32.xlu0 %v171, 60
  %v173 = vpop.permute.xlu0 %172
  %vm174 = vcmask 179200
  %s175 = scalar_lea.vmem %s1, 40
  %176 = vst.msk [vmem:[%s175] sm:$0x1] %vm174, %v173
  %s177 = scalar_lea.vmem %s0, 1
  %v178 = vld [vmem:[%s177] sm:$0x1]
  %179 = vrot.lane.b32.xlu0 %v178, 58
  %v180 = vpop.permute.xlu0 %179
  %vm181 = vcmask 179200
  %s182 = scalar_lea.vmem %s1, 9
  %183 = vst.msk [vmem:[%s182] sm:$0x1] %vm181, %v180
  %s184 = scalar_lea.vmem %s0, 2
  %v185 = vld [vmem:[%s184] sm:$0x1]
  %186 = vrot.lane.b32.xlu0 %v185, 54
  %v187 = vpop.permute.xlu0 %186
  %vm188 = vcmask 179200
  %s189 = scalar_lea.vmem %s1, 15
  %190 = vst.msk [vmem:[%s189] sm:$0x1] %vm188, %v187
  %s191 = scalar_lea.vmem %s0, 3
  %v192 = vld [vmem:[%s191] sm:$0x1]
  %193 = vrot.lane.b32.xlu0 %v192, 50
  %v194 = vpop.permute.xlu0 %193
  %vm195 = vcmask 179200
  %s196 = scalar_lea.vmem %s1, 21
  %197 = vst.msk [vmem:[%s196] sm:$0x1] %vm195, %v194
  %s198 = scalar_lea.vmem %s0, 4
  %v199 = vld [vmem:[%s198] sm:$0x1]
  %200 = vrot.lane.b32.xlu0 %v199, 46
  %v201 = vpop.permute.xlu0 %200
  %vm202 = vcmask 179200
  %s203 = scalar_lea.vmem %s1, 29
  %204 = vst.msk [vmem:[%s203] sm:$0x1] %vm202, %v201
  %s205 = scalar_lea.vmem %s0, 5
  %v206 = vld [vmem:[%s205] sm:$0x1]
  %207 = vrot.lane.b32.xlu0 %v206, 42
  %v208 = vpop.permute.xlu0 %207
  %vm209 = vcmask 179200
  %s210 = scalar_lea.vmem %s1, 35
  %211 = vst.msk [vmem:[%s210] sm:$0x1] %vm209, %v208
  %v212 = vld [vmem:[%s0] sm:$0x1]
  %213 = vrot.lane.b32.xlu0 %v212, 40
  %v214 = vpop.permute.xlu0 %213
  %vm215 = vcmask 179200
  %s216 = scalar_lea.vmem %s1, 4
  %217 = vst.msk [vmem:[%s216] sm:$0x1] %vm215, %v214
  %s218 = scalar_lea.vmem %s0, 6
  %v219 = vld [vmem:[%s218] sm:$0x1]
  %220 = vrot.lane.b32.xlu0 %v219, 38
  %v221 = vpop.permute.xlu0 %220
  %vm222 = vcmask 179200
  %s223 = scalar_lea.vmem %s1, 41
  %224 = vst.msk [vmem:[%s223] sm:$0x1] %vm222, %v221
  %s225 = scalar_lea.vmem %s0, 1
  %v226 = vld [vmem:[%s225] sm:$0x1]
  %227 = vrot.lane.b32.xlu0 %v226, 36
  %v228 = vpop.permute.xlu0 %227
  %vm229 = vcmask 179200
  %s230 = scalar_lea.vmem %s1, 10
  %231 = vst.msk [vmem:[%s230] sm:$0x1] %vm229, %v228
  %s232 = scalar_lea.vmem %s0, 2
  %v233 = vld [vmem:[%s232] sm:$0x1]
  %234 = vrot.lane.b32.xlu0 %v233, 32
  %v235 = vpop.permute.xlu0 %234
  %vm236 = vcmask 179200
  %s237 = scalar_lea.vmem %s1, 16
  %238 = vst.msk [vmem:[%s237] sm:$0x1] %vm236, %v235
  %s239 = scalar_lea.vmem %s0, 3
  %v240 = vld [vmem:[%s239] sm:$0x1]
  %241 = vrot.lane.b32.xlu0 %v240, 28
  %v242 = vpop.permute.xlu0 %241
  %vm243 = vcmask 179200
  %s244 = scalar_lea.vmem %s1, 24
  %245 = vst.msk [vmem:[%s244] sm:$0x1] %vm243, %v242
  %s246 = scalar_lea.vmem %s0, 4
  %v247 = vld [vmem:[%s246] sm:$0x1]
  %248 = vrot.lane.b32.xlu0 %v247, 24
  %v249 = vpop.permute.xlu0 %248
  %vm250 = vcmask 179200
  %s251 = scalar_lea.vmem %s1, 30
  %252 = vst.msk [vmem:[%s251] sm:$0x1] %vm250, %v249
  %s253 = scalar_lea.vmem %s0, 5
  %v254 = vld [vmem:[%s253] sm:$0x1]
  %s255 = scalar_lea.vmem %s0, 6
  %v256 = vld [vmem:[%s255] sm:$0x1]
  %vm257 = vcmask 883712
  %v258 = vsel %vm257, %v256, %v254
  %259 = vrot.lane.b32.xlu0 %v258, 20
  %v260 = vpop.permute.xlu0 %259
  %vm261 = vcmask 162816
  %s262 = scalar_lea.vmem %s1, 36
  %263 = vst.msk [vmem:[%s262] sm:$0x1] %vm261, %v260
  %vm264 = vcmask 179360
  %s265 = scalar_lea.vmem %s1, 36
  %266 = vst.msk [vmem:[%s265] sm:$0x1] %vm264, %v260
  %v267 = vld [vmem:[%s0] sm:$0x1]
  %s268 = scalar_lea.vmem %s0, 1
  %v269 = vld [vmem:[%s268] sm:$0x1]
  %vm270 = vcmask 900096
  %v271 = vsel %vm270, %v269, %v267
  %272 = vrot.lane.b32.xlu0 %v271, 18
  %v273 = vpop.permute.xlu0 %272
  %vm274 = vcmask 146432
  %s275 = scalar_lea.vmem %s1, 5
  %276 = vst.msk [vmem:[%s275] sm:$0x1] %vm274, %v273
  %vm277 = vcmask 179344
  %s278 = scalar_lea.vmem %s1, 5
  %279 = vst.msk [vmem:[%s278] sm:$0x1] %vm277, %v273
  %s280 = scalar_lea.vmem %s0, 6
  %v281 = vld [vmem:[%s280] sm:$0x1]
  %s282 = scalar_lea.vmem %s0, 7
  %v283 = vld [vmem:[%s282] sm:$0x1]
  %vm284 = vcmask 916480
  %v285 = vsel %vm284, %v283, %v281
  %286 = vrot.lane.b32.xlu0 %v285, 16
  %v287 = vpop.permute.xlu0 %286
  %vm288 = vcmask 130048
  %s289 = scalar_lea.vmem %s1, 42
  %290 = vst.msk [vmem:[%s289] sm:$0x1] %vm288, %v287
  %vm291 = vcmask 179328
  %s292 = scalar_lea.vmem %s1, 42
  %293 = vst.msk [vmem:[%s292] sm:$0x1] %vm291, %v287
  %s294 = scalar_lea.vmem %s0, 1
  %v295 = vld [vmem:[%s294] sm:$0x1]
  %s296 = scalar_lea.vmem %s0, 2
  %v297 = vld [vmem:[%s296] sm:$0x1]
  %vm298 = vcmask 932864
  %v299 = vsel %vm298, %v297, %v295
  %300 = vrot.lane.b32.xlu0 %v299, 14
  %v301 = vpop.permute.xlu0 %300
  %vm302 = vcmask 113664
  %s303 = scalar_lea.vmem %s1, 11
  %304 = vst.msk [vmem:[%s303] sm:$0x1] %vm302, %v301
  %vm305 = vcmask 179312
  %s306 = scalar_lea.vmem %s1, 11
  %307 = vst.msk [vmem:[%s306] sm:$0x1] %vm305, %v301
  %s308 = scalar_lea.vmem %s0, 2
  %v309 = vld [vmem:[%s308] sm:$0x1]
  %s310 = scalar_lea.vmem %s0, 3
  %v311 = vld [vmem:[%s310] sm:$0x1]
  %vm312 = vcmask 965632
  %v313 = vsel %vm312, %v311, %v309
  %314 = vrot.lane.b32.xlu0 %v313, 10
  %v315 = vpop.permute.xlu0 %314
  %vm316 = vcmask 80896
  %s317 = scalar_lea.vmem %s1, 17
  %318 = vst.msk [vmem:[%s317] sm:$0x1] %vm316, %v315
  %vm319 = vcmask 179280
  %s320 = scalar_lea.vmem %s1, 17
  %321 = vst.msk [vmem:[%s320] sm:$0x1] %vm319, %v315
  %s322 = scalar_lea.vmem %s0, 3
  %v323 = vld [vmem:[%s322] sm:$0x1]
  %s324 = scalar_lea.vmem %s0, 4
  %v325 = vld [vmem:[%s324] sm:$0x1]
  %vm326 = vcmask 998400
  %v327 = vsel %vm326, %v325, %v323
  %328 = vrot.lane.b32.xlu0 %v327, 6
  %v329 = vpop.permute.xlu0 %328
  %vm330 = vcmask 48128
  %s331 = scalar_lea.vmem %s1, 25
  %332 = vst.msk [vmem:[%s331] sm:$0x1] %vm330, %v329
  %vm333 = vcmask 179248
  %s334 = scalar_lea.vmem %s1, 25
  %335 = vst.msk [vmem:[%s334] sm:$0x1] %vm333, %v329
  %s336 = scalar_lea.vmem %s0, 4
  %v337 = vld [vmem:[%s336] sm:$0x1]
  %s338 = scalar_lea.vmem %s0, 5
  %v339 = vld [vmem:[%s338] sm:$0x1]
  %vm340 = vcmask 1031168
  %v341 = vsel %vm340, %v339, %v337
  %342 = vrot.lane.b32.xlu0 %v341, 2
  %v343 = vpop.permute.xlu0 %342
  %vm344 = vcmask 15360
  %s345 = scalar_lea.vmem %s1, 31
  %346 = vst.msk [vmem:[%s345] sm:$0x1] %vm344, %v343
  %vm347 = vcmask 179216
  %s348 = scalar_lea.vmem %s1, 31
  %349 = vst.msk [vmem:[%s348] sm:$0x1] %vm347, %v343

// kernel: cfconv1_forward.1
$region0: #{cfconv1_forward.1}
  #allocation0 [shape = 'u32[]', space=smem, size = 0x4, offset = 0x4, fixed_abs, tag = 'smem constant byte address 0x4 - core index']
  #allocation1 [shape = 'u32[144,128]{1,0:T(1,128)}', space=vmem, size = 0x12000, scoped, tag = 'internal scratch']
  %s0 = inlined_call_operand.vmem [shape: f32[4,1152], index: 0, kind: input, shape index: {}]
  %s1 = inlined_call_operand.vmem [shape: f32[56,4], index: 1, kind: input, shape index: {}]
  %s2 = inlined_call_operand.vmem [shape: f32[1,1152], index: 2, kind: output, shape index: {}]
  %s3 = sld [smem:[#allocation0]]
  $region18: #{cfconv1_forward.1} parent=0
    _
  %s5 = ssub.s32 1, %s3
  %s6 = scalar_select 0, %s5, %s3
  // Predicated region
  $region2: #{cfconv1_forward.1} parent=0 // pred_check
    _
  $region3: #{cfconv1_forward.1} parent=0 // pred_check_branch
    %8 = sbr.rel (0) target = $region5
  $region4: #{cfconv1_forward.1} parent=0 // pred_region
    _
  $region5: #{cfconv1_forward.1} parent=0 // pred_fallthru
    _
  // Predicated region
  $region6: #{cfconv1_forward.1} parent=0 // pred_check
    _
  $region7: #{cfconv1_forward.1} parent=0 // pred_check_branch
    %10 = sbr.rel (0) target = $region9
  $region8: #{cfconv1_forward.1} parent=0 // pred_region
    _
  $region9: #{cfconv1_forward.1} parent=0 // pred_fallthru
    _
  %v11 = vld [vmem:[%s0] sm:$0xff]
  %v12 = vld [vmem:[%s0 + $0x8] sm:$0xff]
  %v13 = vld [vmem:[%s0 + $0x10] sm:$0xff]
  %v14 = vld [vmem:[%s0 + $0x18] sm:$0xff]
  %v15 = vld [vmem:[%s0 + $0x20] sm:$0xf]
  %v16 = vld [vmem:[%s1] sm:$0xff]
  %v17 = vld [vmem:[%s1 + $0x8] sm:$0xff]
  %v18 = vld [vmem:[%s1 + $0x10] sm:$0xff]
  %v19 = vld [vmem:[%s1 + $0x18] sm:$0xff]
  %v20 = vld [vmem:[%s1 + $0x20] sm:$0xff]
  %v21 = vld [vmem:[%s1 + $0x28] sm:$0xff]
  %v22 = vld [vmem:[%s1 + $0x30] sm:$0xff]
  %24 = vset.pattern.permute.xlu0 0
  %25 = vperm.xlu0 %24, %v16
  %v26 = vpop.permute.xlu0 %25
  %v33 = vlaneseq
  %v34 = vshrl.u32 %v33, 7
  %v35 = vsub.s32 0, %v34
  %v36 = vrot.slane %v11, %v35
  %v37 = vlaneseq
  %v38 = vshrl.u32 %v37, 7
  %v39 = vsub.s32 4, %v38
  %v40 = vrot.slane %v11, %v39
  %v41 = vlaneseq
  %v42 = vshrl.u32 %v41, 7
  %v43 = vsub.s32 0, %v42
  %v44 = vrot.slane %v12, %v43
  %v45 = vlaneseq
  %v46 = vshrl.u32 %v45, 7
  %v47 = vsub.s32 4, %v46
  %v48 = vrot.slane %v12, %v47
  %v49 = vlaneseq
  %v50 = vshrl.u32 %v49, 7
  %v51 = vsub.s32 0, %v50
  %v52 = vrot.slane %v13, %v51
  %v53 = vlaneseq
  %v54 = vshrl.u32 %v53, 7
  %v55 = vsub.s32 4, %v54
  %v56 = vrot.slane %v13, %v55
  %v57 = vlaneseq
  %v58 = vshrl.u32 %v57, 7
  %v59 = vsub.s32 0, %v58
  %v60 = vrot.slane %v14, %v59
  %v61 = vlaneseq
  %v62 = vshrl.u32 %v61, 7
  %v63 = vsub.s32 4, %v62
  %v64 = vrot.slane %v14, %v63
  %v65 = vlaneseq
  %v66 = vshrl.u32 %v65, 7
  %v67 = vsub.s32 0, %v66
  %v68 = vrot.slane %v15, %v67
  %v78 = vlaneseq
  %v79 = vshrl.u32 %v78, 7
  %v80 = vsub.s32 0, %v79
  %v81 = vrot.slane %v36, %v80
  %v82 = vlaneseq
  %v83 = vshrl.u32 %v82, 7
  %v84 = vsub.s32 0, %v83
  %v85 = vrot.slane %v40, %v84
  %v86 = vlaneseq
  %v87 = vshrl.u32 %v86, 7
  %v88 = vsub.s32 0, %v87
  %v89 = vrot.slane %v44, %v88
  %v90 = vlaneseq
  %v91 = vshrl.u32 %v90, 7
  %v92 = vsub.s32 0, %v91
  %v93 = vrot.slane %v48, %v92
  %v94 = vlaneseq
  %v95 = vshrl.u32 %v94, 7
  %v96 = vsub.s32 0, %v95
  %v97 = vrot.slane %v52, %v96
  %v98 = vlaneseq
  %v99 = vshrl.u32 %v98, 7
  %v100 = vsub.s32 0, %v99
  %v101 = vrot.slane %v56, %v100
  %v102 = vlaneseq
  %v103 = vshrl.u32 %v102, 7
  %v104 = vsub.s32 0, %v103
  %v105 = vrot.slane %v60, %v104
  %v106 = vlaneseq
  %v107 = vshrl.u32 %v106, 7
  %v108 = vsub.s32 0, %v107
  %v109 = vrot.slane %v64, %v108
  %v110 = vlaneseq
  %v111 = vshrl.u32 %v110, 7
  %v112 = vsub.s32 0, %v111
  %v113 = vrot.slane %v68, %v112
  %v114 = vmul.f32 %v26, %v81
  %v115 = vmul.f32 %v26, %v85
  %v116 = vmul.f32 %v26, %v89
  %v117 = vmul.f32 %v26, %v93
  %v118 = vmul.f32 %v26, %v97
  %v119 = vmul.f32 %v26, %v101
  %v120 = vmul.f32 %v26, %v105
  %v121 = vmul.f32 %v26, %v109
  %v122 = vmul.f32 %v26, %v113
  %123 = vset.pattern.permute.xlu0 1
  %124 = vperm.xlu0 %123, %v16
  %v125 = vpop.permute.xlu0 %124
  %v127 = vlaneseq
  %v128 = vshrl.u32 %v127, 7
  %v129 = vsub.s32 1, %v128
  %v130 = vrot.slane %v11, %v129
  %v131 = vlaneseq
  %v132 = vshrl.u32 %v131, 7
  %v133 = vsub.s32 5, %v132
  %v134 = vrot.slane %v11, %v133
  %v135 = vlaneseq
  %v136 = vshrl.u32 %v135, 7
  %v137 = vsub.s32 1, %v136
  %v138 = vrot.slane %v12, %v137
  %v139 = vlaneseq
  %v140 = vshrl.u32 %v139, 7
  %v141 = vsub.s32 5, %v140
  %v142 = vrot.slane %v12, %v141
  %v143 = vlaneseq
  %v144 = vshrl.u32 %v143, 7
  %v145 = vsub.s32 1, %v144
  %v146 = vrot.slane %v13, %v145
  %v147 = vlaneseq
  %v148 = vshrl.u32 %v147, 7
  %v149 = vsub.s32 5, %v148
  %v150 = vrot.slane %v13, %v149
  %v151 = vlaneseq
  %v152 = vshrl.u32 %v151, 7
  %v153 = vsub.s32 1, %v152
  %v154 = vrot.slane %v14, %v153
  %v155 = vlaneseq
  %v156 = vshrl.u32 %v155, 7
  %v157 = vsub.s32 5, %v156
  %v158 = vrot.slane %v14, %v157
  %v159 = vlaneseq
  %v160 = vshrl.u32 %v159, 7
  %v161 = vsub.s32 1, %v160
  %v162 = vrot.slane %v15, %v161
  %v172 = vlaneseq
  %v173 = vshrl.u32 %v172, 7
  %v174 = vsub.s32 1, %v173
  %v175 = vrot.slane %v130, %v174
  %v176 = vlaneseq
  %v177 = vshrl.u32 %v176, 7
  %v178 = vsub.s32 1, %v177
  %v179 = vrot.slane %v134, %v178
  %v180 = vlaneseq
  %v181 = vshrl.u32 %v180, 7
  %v182 = vsub.s32 1, %v181
  %v183 = vrot.slane %v138, %v182
  %v184 = vlaneseq
  %v185 = vshrl.u32 %v184, 7
  %v186 = vsub.s32 1, %v185
  %v187 = vrot.slane %v142, %v186
  %v188 = vlaneseq
  %v189 = vshrl.u32 %v188, 7
  %v190 = vsub.s32 1, %v189
  %v191 = vrot.slane %v146, %v190
  %v192 = vlaneseq
  %v193 = vshrl.u32 %v192, 7
  %v194 = vsub.s32 1, %v193
  %v195 = vrot.slane %v150, %v194
  %v196 = vlaneseq
  %v197 = vshrl.u32 %v196, 7
  %v198 = vsub.s32 1, %v197
  %v199 = vrot.slane %v154, %v198
  %v200 = vlaneseq
  %v201 = vshrl.u32 %v200, 7
  %v202 = vsub.s32 1, %v201
  %v203 = vrot.slane %v158, %v202
  %v204 = vlaneseq
  %v205 = vshrl.u32 %v204, 7
  %v206 = vsub.s32 1, %v205
  %v207 = vrot.slane %v162, %v206
  %v208 = vmul.f32 %v125, %v175
  %v209 = vmul.f32 %v125, %v179
  %v210 = vmul.f32 %v125, %v183
  %v211 = vmul.f32 %v125, %v187
  %v212 = vmul.f32 %v125, %v191
  %v213 = vmul.f32 %v125, %v195
  %v214 = vmul.f32 %v125, %v199
  %v215 = vmul.f32 %v125, %v203
  %v216 = vmul.f32 %v125, %v207
  %v217 = vadd.f32 %v114, %v208
  %v218 = vadd.f32 %v115, %v209
  %v219 = vadd.f32 %v116, %v210
  %v220 = vadd.f32 %v117, %v211
  %v221 = vadd.f32 %v118, %v212
  %v222 = vadd.f32 %v119, %v213
  %v223 = vadd.f32 %v120, %v214
  %v224 = vadd.f32 %v121, %v215
  %v225 = vadd.f32 %v122, %v216
  %226 = vset.pattern.permute.xlu0 2
  %227 = vperm.xlu0 %226, %v16
  %v228 = vpop.permute.xlu0 %227
  %v230 = vlaneseq
  %v231 = vshrl.u32 %v230, 7
  %v232 = vsub.s32 2, %v231
  %v233 = vrot.slane %v11, %v232
  %v234 = vlaneseq
  %v235 = vshrl.u32 %v234, 7
  %v236 = vsub.s32 6, %v235
  %v237 = vrot.slane %v11, %v236
  %v238 = vlaneseq
  %v239 = vshrl.u32 %v238, 7
  %v240 = vsub.s32 2, %v239
  %v241 = vrot.slane %v12, %v240
  %v242 = vlaneseq
  %v243 = vshrl.u32 %v242, 7
  %v244 = vsub.s32 6, %v243
  %v245 = vrot.slane %v12, %v244
  %v246 = vlaneseq
  %v247 = vshrl.u32 %v246, 7
  %v248 = vsub.s32 2, %v247
  %v249 = vrot.slane %v13, %v248
  %v250 = vlaneseq
  %v251 = vshrl.u32 %v250, 7
  %v252 = vsub.s32 6, %v251
  %v253 = vrot.slane %v13, %v252
  %v254 = vlaneseq
  %v255 = vshrl.u32 %v254, 7
  %v256 = vsub.s32 2, %v255
  %v257 = vrot.slane %v14, %v256
  %v258 = vlaneseq
  %v259 = vshrl.u32 %v258, 7
  %v260 = vsub.s32 6, %v259
  %v261 = vrot.slane %v14, %v260
  %v262 = vlaneseq
  %v263 = vshrl.u32 %v262, 7
  %v264 = vsub.s32 2, %v263
  %v265 = vrot.slane %v15, %v264
  %v275 = vlaneseq
  %v276 = vshrl.u32 %v275, 7
  %v277 = vsub.s32 2, %v276
  %v278 = vrot.slane %v233, %v277
  %v279 = vlaneseq
  %v280 = vshrl.u32 %v279, 7
  %v281 = vsub.s32 2, %v280
  %v282 = vrot.slane %v237, %v281
  %v283 = vlaneseq
  %v284 = vshrl.u32 %v283, 7
  %v285 = vsub.s32 2, %v284
  %v286 = vrot.slane %v241, %v285
  %v287 = vlaneseq
  %v288 = vshrl.u32 %v287, 7
  %v289 = vsub.s32 2, %v288
  %v290 = vrot.slane %v245, %v289
  %v291 = vlaneseq
  %v292 = vshrl.u32 %v291, 7
  %v293 = vsub.s32 2, %v292
  %v294 = vrot.slane %v249, %v293
  %v295 = vlaneseq
  %v296 = vshrl.u32 %v295, 7
  %v297 = vsub.s32 2, %v296
  %v298 = vrot.slane %v253, %v297
  %v299 = vlaneseq
  %v300 = vshrl.u32 %v299, 7
  %v301 = vsub.s32 2, %v300
  %v302 = vrot.slane %v257, %v301
  %v303 = vlaneseq
  %v304 = vshrl.u32 %v303, 7
  %v305 = vsub.s32 2, %v304
  %v306 = vrot.slane %v261, %v305
  %v307 = vlaneseq
  %v308 = vshrl.u32 %v307, 7
  %v309 = vsub.s32 2, %v308
  %v310 = vrot.slane %v265, %v309
  %v311 = vmul.f32 %v228, %v278
  %v312 = vmul.f32 %v228, %v282
  %v313 = vmul.f32 %v228, %v286
  %v314 = vmul.f32 %v228, %v290
  %v315 = vmul.f32 %v228, %v294
  %v316 = vmul.f32 %v228, %v298
  %v317 = vmul.f32 %v228, %v302
  %v318 = vmul.f32 %v228, %v306
  %v319 = vmul.f32 %v228, %v310
  %v320 = vadd.f32 %v217, %v311
  %v321 = vadd.f32 %v218, %v312
  %v322 = vadd.f32 %v219, %v313
  %v323 = vadd.f32 %v220, %v314
  %v324 = vadd.f32 %v221, %v315
  %v325 = vadd.f32 %v222, %v316
  %v326 = vadd.f32 %v223, %v317
  %v327 = vadd.f32 %v224, %v318
  %v328 = vadd.f32 %v225, %v319
  %329 = vset.pattern.permute.xlu0 3
  %330 = vperm.xlu0 %329, %v16
  %v331 = vpop.permute.xlu0 %330
  %v333 = vlaneseq
  %v334 = vshrl.u32 %v333, 7
  %v335 = vsub.s32 3, %v334
  %v336 = vrot.slane %v11, %v335
  %v337 = vlaneseq
  %v338 = vshrl.u32 %v337, 7
  %v339 = vsub.s32 7, %v338
  %v340 = vrot.slane %v11, %v339
  %v341 = vlaneseq
  %v342 = vshrl.u32 %v341, 7
  %v343 = vsub.s32 3, %v342
  %v344 = vrot.slane %v12, %v343
  %v345 = vlaneseq
  %v346 = vshrl.u32 %v345, 7
  %v347 = vsub.s32 7, %v346
  %v348 = vrot.slane %v12, %v347
  %v349 = vlaneseq
  %v350 = vshrl.u32 %v349, 7
  %v351 = vsub.s32 3, %v350
  %v352 = vrot.slane %v13, %v351
  %v353 = vlaneseq
  %v354 = vshrl.u32 %v353, 7
  %v355 = vsub.s32 7, %v354
  %v356 = vrot.slane %v13, %v355
  %v357 = vlaneseq
  %v358 = vshrl.u32 %v357, 7
  %v359 = vsub.s32 3, %v358
  %v360 = vrot.slane %v14, %v359
  %v361 = vlaneseq
  %v362 = vshrl.u32 %v361, 7
  %v363 = vsub.s32 7, %v362
  %v364 = vrot.slane %v14, %v363
  %v365 = vlaneseq
  %v366 = vshrl.u32 %v365, 7
  %v367 = vsub.s32 3, %v366
  %v368 = vrot.slane %v15, %v367
  %v378 = vlaneseq
  %v379 = vshrl.u32 %v378, 7
  %v380 = vsub.s32 3, %v379
  %v381 = vrot.slane %v336, %v380
  %v382 = vlaneseq
  %v383 = vshrl.u32 %v382, 7
  %v384 = vsub.s32 3, %v383
  %v385 = vrot.slane %v340, %v384
  %v386 = vlaneseq
  %v387 = vshrl.u32 %v386, 7
  %v388 = vsub.s32 3, %v387
  %v389 = vrot.slane %v344, %v388
  %v390 = vlaneseq
  %v391 = vshrl.u32 %v390, 7
  %v392 = vsub.s32 3, %v391
  %v393 = vrot.slane %v348, %v392
  %v394 = vlaneseq
  %v395 = vshrl.u32 %v394, 7
  %v396 = vsub.s32 3, %v395
  %v397 = vrot.slane %v352, %v396
  %v398 = vlaneseq
  %v399 = vshrl.u32 %v398, 7
  %v400 = vsub.s32 3, %v399
  %v401 = vrot.slane %v356, %v400
  %v402 = vlaneseq
  %v403 = vshrl.u32 %v402, 7
  %v404 = vsub.s32 3, %v403
  %v405 = vrot.slane %v360, %v404
  %v406 = vlaneseq
  %v407 = vshrl.u32 %v406, 7
  %v408 = vsub.s32 3, %v407
  %v409 = vrot.slane %v364, %v408
  %v410 = vlaneseq
  %v411 = vshrl.u32 %v410, 7
  %v412 = vsub.s32 3, %v411
  %v413 = vrot.slane %v368, %v412
  %v414 = vmul.f32 %v331, %v381
  %v415 = vmul.f32 %v331, %v385
  %v416 = vmul.f32 %v331, %v389
  %v417 = vmul.f32 %v331, %v393
  %v418 = vmul.f32 %v331, %v397
  %v419 = vmul.f32 %v331, %v401
  %v420 = vmul.f32 %v331, %v405
  %v421 = vmul.f32 %v331, %v409
  %v422 = vmul.f32 %v331, %v413
  %v423 = vadd.f32 %v320, %v414
  %v424 = vadd.f32 %v321, %v415
  %v425 = vadd.f32 %v322, %v416
  %v426 = vadd.f32 %v323, %v417
  %v427 = vadd.f32 %v324, %v418
  %v428 = vadd.f32 %v325, %v419
  %v429 = vadd.f32 %v326, %v420
  %v430 = vadd.f32 %v327, %v421
  %v431 = vadd.f32 %v328, %v422
  %s433 = sor.u32 256, 4
  %434 = vrot.lane.b32.xlu0 %v423, %s433
  %v435 = vpop.permute.xlu0 %434
  %s437 = sor.u32 256, 4
  %438 = vrot.lane.b32.xlu0 %v424, %s437
  %v439 = vpop.permute.xlu0 %438
  %s441 = sor.u32 256, 4
  %442 = vrot.lane.b32.xlu0 %v425, %s441
  %v443 = vpop.permute.xlu0 %442
  %s445 = sor.u32 256, 4
  %446 = vrot.lane.b32.xlu0 %v426, %s445
  %v447 = vpop.permute.xlu0 %446
  %s449 = sor.u32 256, 4
  %450 = vrot.lane.b32.xlu0 %v427, %s449
  %v451 = vpop.permute.xlu0 %450
  %s453 = sor.u32 256, 4
  %454 = vrot.lane.b32.xlu0 %v428, %s453
  %v455 = vpop.permute.xlu0 %454
  %s457 = sor.u32 256, 4
  %458 = vrot.lane.b32.xlu0 %v429, %s457
  %v459 = vpop.permute.xlu0 %458
  %s461 = sor.u32 256, 4
  %462 = vrot.lane.b32.xlu0 %v430, %s461
  %v463 = vpop.permute.xlu0 %462
  %s465 = sor.u32 256, 4
  %466 = vrot.lane.b32.xlu0 %v431, %s465
  %v467 = vpop.permute.xlu0 %466
  %v468 = vlaneseq
  %v469 = vshrl.u32 %v468, 7
  %v470 = vadd.s32 %v469, 4
  %v471 = vlaneseq
  %v472 = vand.u32 %v471, 127
  %vm473 = vcmp.lt.s32.totalorder %v472, %v470
  %v474 = vsel %vm473, %v463, %v467
  %v475 = vsel %vm473, %v459, %v463
  %v476 = vsel %vm473, %v455, %v459
  %v477 = vsel %vm473, %v451, %v455
  %v478 = vsel %vm473, %v447, %v451
  %v479 = vsel %vm473, %v443, %v447
  %v480 = vsel %vm473, %v439, %v443
  %v481 = vsel %vm473, %v435, %v439
  %v482 = vsel %vm473, %v467, %v435
  %484 = vset.pattern.permute.xlu0 0
  %485 = vperm.xlu0 %484, %v17
  %v486 = vpop.permute.xlu0 %485
  %v488 = vmul.f32 %v486, %v81
  %v489 = vmul.f32 %v486, %v85
  %v490 = vmul.f32 %v486, %v89
  %v491 = vmul.f32 %v486, %v93
  %v492 = vmul.f32 %v486, %v97
  %v493 = vmul.f32 %v486, %v101
  %v494 = vmul.f32 %v486, %v105
  %v495 = vmul.f32 %v486, %v109
  %v496 = vmul.f32 %v486, %v113
  %497 = vset.pattern.permute.xlu0 1
  %498 = vperm.xlu0 %497, %v17
  %v499 = vpop.permute.xlu0 %498
  %v501 = vmul.f32 %v499, %v175
  %v502 = vmul.f32 %v499, %v179
  %v503 = vmul.f32 %v499, %v183
  %v504 = vmul.f32 %v499, %v187
  %v505 = vmul.f32 %v499, %v191
  %v506 = vmul.f32 %v499, %v195
  %v507 = vmul.f32 %v499, %v199
  %v508 = vmul.f32 %v499, %v203
  %v509 = vmul.f32 %v499, %v207
  %v510 = vadd.f32 %v488, %v501
  %v511 = vadd.f32 %v489, %v502
  %v512 = vadd.f32 %v490, %v503
  %v513 = vadd.f32 %v491, %v504
  %v514 = vadd.f32 %v492, %v505
  %v515 = vadd.f32 %v493, %v506
  %v516 = vadd.f32 %v494, %v507
  %v517 = vadd.f32 %v495, %v508
  %v518 = vadd.f32 %v496, %v509
  %519 = vset.pattern.permute.xlu0 2
  %520 = vperm.xlu0 %519, %v17
  %v521 = vpop.permute.xlu0 %520
  %v523 = vmul.f32 %v521, %v278
  %v524 = vmul.f32 %v521, %v282
  %v525 = vmul.f32 %v521, %v286
  %v526 = vmul.f32 %v521, %v290
  %v527 = vmul.f32 %v521, %v294
  %v528 = vmul.f32 %v521, %v298
  %v529 = vmul.f32 %v521, %v302
  %v530 = vmul.f32 %v521, %v306
  %v531 = vmul.f32 %v521, %v310
  %v532 = vadd.f32 %v510, %v523
  %v533 = vadd.f32 %v511, %v524
  %v534 = vadd.f32 %v512, %v525
  %v535 = vadd.f32 %v513, %v526
  %v536 = vadd.f32 %v514, %v527
  %v537 = vadd.f32 %v515, %v528
  %v538 = vadd.f32 %v516, %v529
  %v539 = vadd.f32 %v517, %v530
  %v540 = vadd.f32 %v518, %v531
  %541 = vset.pattern.permute.xlu0 3
  %542 = vperm.xlu0 %541, %v17
  %v543 = vpop.permute.xlu0 %542
  %v545 = vmul.f32 %v543, %v381
  %v546 = vmul.f32 %v543, %v385
  %v547 = vmul.f32 %v543, %v389
  %v548 = vmul.f32 %v543, %v393
  %v549 = vmul.f32 %v543, %v397
  %v550 = vmul.f32 %v543, %v401
  %v551 = vmul.f32 %v543, %v405
  %v552 = vmul.f32 %v543, %v409
  %v553 = vmul.f32 %v543, %v413
  %v554 = vadd.f32 %v532, %v545
  %v555 = vadd.f32 %v533, %v546
  %v556 = vadd.f32 %v534, %v547
  %v557 = vadd.f32 %v535, %v548
  %v558 = vadd.f32 %v536, %v549
  %v559 = vadd.f32 %v537, %v550
  %v560 = vadd.f32 %v538, %v551
  %v561 = vadd.f32 %v539, %v552
  %v562 = vadd.f32 %v540, %v553
  %s564 = sor.u32 256, 110
  %565 = vrot.lane.b32.xlu0 %v554, %s564
  %v566 = vpop.permute.xlu0 %565
  %s568 = sor.u32 256, 110
  %569 = vrot.lane.b32.xlu0 %v555, %s568
  %v570 = vpop.permute.xlu0 %569
  %s572 = sor.u32 256, 110
  %573 = vrot.lane.b32.xlu0 %v556, %s572
  %v574 = vpop.permute.xlu0 %573
  %s576 = sor.u32 256, 110
  %577 = vrot.lane.b32.xlu0 %v557, %s576
  %v578 = vpop.permute.xlu0 %577
  %s580 = sor.u32 256, 110
  %581 = vrot.lane.b32.xlu0 %v558, %s580
  %v582 = vpop.permute.xlu0 %581
  %s584 = sor.u32 256, 110
  %585 = vrot.lane.b32.xlu0 %v559, %s584
  %v586 = vpop.permute.xlu0 %585
  %s588 = sor.u32 256, 110
  %589 = vrot.lane.b32.xlu0 %v560, %s588
  %v590 = vpop.permute.xlu0 %589
  %s592 = sor.u32 256, 110
  %593 = vrot.lane.b32.xlu0 %v561, %s592
  %v594 = vpop.permute.xlu0 %593
  %s596 = sor.u32 256, 110
  %597 = vrot.lane.b32.xlu0 %v562, %s596
  %v598 = vpop.permute.xlu0 %597
  %v599 = vadd.s32 %v469, 110
  %vm600 = vcmp.lt.s32.totalorder %v472, %v599
  %v601 = vsel %vm600, %v594, %v598
  %v602 = vsel %vm600, %v590, %v594
  %v603 = vsel %vm600, %v586, %v590
  %v604 = vsel %vm600, %v582, %v586
  %v605 = vsel %vm600, %v578, %v582
  %v606 = vsel %vm600, %v574, %v578
  %v607 = vsel %vm600, %v570, %v574
  %v608 = vsel %vm600, %v566, %v570
  %v609 = vsel %vm600, %v598, %v566
  %v610 = vadd.f32 %v474, %v609
  %v611 = vadd.f32 %v482, %v608
  %v612 = vadd.f32 %v481, %v607
  %v613 = vadd.f32 %v480, %v606
  %v614 = vadd.f32 %v479, %v605
  %v615 = vadd.f32 %v478, %v604
  %v616 = vadd.f32 %v477, %v603
  %v617 = vadd.f32 %v476, %v602
  %v618 = vadd.f32 %v475, %v601
  %620 = vset.pattern.permute.xlu0 0
  %621 = vperm.xlu0 %620, %v18
  %v622 = vpop.permute.xlu0 %621
  %v624 = vmul.f32 %v622, %v81
  %v625 = vmul.f32 %v622, %v85
  %v626 = vmul.f32 %v622, %v89
  %v627 = vmul.f32 %v622, %v93
  %v628 = vmul.f32 %v622, %v97
  %v629 = vmul.f32 %v622, %v101
  %v630 = vmul.f32 %v622, %v105
  %v631 = vmul.f32 %v622, %v109
  %v632 = vmul.f32 %v622, %v113
  %633 = vset.pattern.permute.xlu0 1
  %634 = vperm.xlu0 %633, %v18
  %v635 = vpop.permute.xlu0 %634
  %v637 = vmul.f32 %v635, %v175
  %v638 = vmul.f32 %v635, %v179
  %v639 = vmul.f32 %v635, %v183
  %v640 = vmul.f32 %v635, %v187
  %v641 = vmul.f32 %v635, %v191
  %v642 = vmul.f32 %v635, %v195
  %v643 = vmul.f32 %v635, %v199
  %v644 = vmul.f32 %v635, %v203
  %v645 = vmul.f32 %v635, %v207
  %v646 = vadd.f32 %v624, %v637
  %v647 = vadd.f32 %v625, %v638
  %v648 = vadd.f32 %v626, %v639
  %v649 = vadd.f32 %v627, %v640
  %v650 = vadd.f32 %v628, %v641
  %v651 = vadd.f32 %v629, %v642
  %v652 = vadd.f32 %v630, %v643
  %v653 = vadd.f32 %v631, %v644
  %v654 = vadd.f32 %v632, %v645
  %655 = vset.pattern.permute.xlu0 2
  %656 = vperm.xlu0 %655, %v18
  %v657 = vpop.permute.xlu0 %656
  %v659 = vmul.f32 %v657, %v278
  %v660 = vmul.f32 %v657, %v282
  %v661 = vmul.f32 %v657, %v286
  %v662 = vmul.f32 %v657, %v290
  %v663 = vmul.f32 %v657, %v294
  %v664 = vmul.f32 %v657, %v298
  %v665 = vmul.f32 %v657, %v302
  %v666 = vmul.f32 %v657, %v306
  %v667 = vmul.f32 %v657, %v310
  %v668 = vadd.f32 %v646, %v659
  %v669 = vadd.f32 %v647, %v660
  %v670 = vadd.f32 %v648, %v661
  %v671 = vadd.f32 %v649, %v662
  %v672 = vadd.f32 %v650, %v663
  %v673 = vadd.f32 %v651, %v664
  %v674 = vadd.f32 %v652, %v665
  %v675 = vadd.f32 %v653, %v666
  %v676 = vadd.f32 %v654, %v667
  %677 = vset.pattern.permute.xlu0 3
  %678 = vperm.xlu0 %677, %v18
  %v679 = vpop.permute.xlu0 %678
  %v681 = vmul.f32 %v679, %v381
  %v682 = vmul.f32 %v679, %v385
  %v683 = vmul.f32 %v679, %v389
  %v684 = vmul.f32 %v679, %v393
  %v685 = vmul.f32 %v679, %v397
  %v686 = vmul.f32 %v679, %v401
  %v687 = vmul.f32 %v679, %v405
  %v688 = vmul.f32 %v679, %v409
  %v689 = vmul.f32 %v679, %v413
  %v690 = vadd.f32 %v668, %v681
  %v691 = vadd.f32 %v669, %v682
  %v692 = vadd.f32 %v670, %v683
  %v693 = vadd.f32 %v671, %v684
  %v694 = vadd.f32 %v672, %v685
  %v695 = vadd.f32 %v673, %v686
  %v696 = vadd.f32 %v674, %v687
  %v697 = vadd.f32 %v675, %v688
  %v698 = vadd.f32 %v676, %v689
  %s700 = sor.u32 256, 88
  %701 = vrot.lane.b32.xlu0 %v690, %s700
  %v702 = vpop.permute.xlu0 %701
  %s704 = sor.u32 256, 88
  %705 = vrot.lane.b32.xlu0 %v691, %s704
  %v706 = vpop.permute.xlu0 %705
  %s708 = sor.u32 256, 88
  %709 = vrot.lane.b32.xlu0 %v692, %s708
  %v710 = vpop.permute.xlu0 %709
  %s712 = sor.u32 256, 88
  %713 = vrot.lane.b32.xlu0 %v693, %s712
  %v714 = vpop.permute.xlu0 %713
  %s716 = sor.u32 256, 88
  %717 = vrot.lane.b32.xlu0 %v694, %s716
  %v718 = vpop.permute.xlu0 %717
  %s720 = sor.u32 256, 88
  %721 = vrot.lane.b32.xlu0 %v695, %s720
  %v722 = vpop.permute.xlu0 %721
  %s724 = sor.u32 256, 88
  %725 = vrot.lane.b32.xlu0 %v696, %s724
  %v726 = vpop.permute.xlu0 %725
  %s728 = sor.u32 256, 88
  %729 = vrot.lane.b32.xlu0 %v697, %s728
  %v730 = vpop.permute.xlu0 %729
  %s732 = sor.u32 256, 88
  %733 = vrot.lane.b32.xlu0 %v698, %s732
  %v734 = vpop.permute.xlu0 %733
  %v735 = vadd.s32 %v469, 88
  %vm736 = vcmp.lt.s32.totalorder %v472, %v735
  %v737 = vsel %vm736, %v730, %v734
  %v738 = vsel %vm736, %v726, %v730
  %v739 = vsel %vm736, %v722, %v726
  %v740 = vsel %vm736, %v718, %v722
  %v741 = vsel %vm736, %v714, %v718
  %v742 = vsel %vm736, %v710, %v714
  %v743 = vsel %vm736, %v706, %v710
  %v744 = vsel %vm736, %v702, %v706
  %v745 = vsel %vm736, %v734, %v702
  %v746 = vadd.f32 %v610, %v745
  %v747 = vadd.f32 %v611, %v744
  %v748 = vadd.f32 %v612, %v743
  %v749 = vadd.f32 %v613, %v742
  %v750 = vadd.f32 %v614, %v741
  %v751 = vadd.f32 %v615, %v740
  %v752 = vadd.f32 %v616, %v739
  %v753 = vadd.f32 %v617, %v738
  %v754 = vadd.f32 %v618, %v737
  %756 = vset.pattern.permute.xlu0 0
  %757 = vperm.xlu0 %756, %v19
  %v758 = vpop.permute.xlu0 %757
  %v760 = vmul.f32 %v758, %v81
  %v761 = vmul.f32 %v758, %v85
  %v762 = vmul.f32 %v758, %v89
  %v763 = vmul.f32 %v758, %v93
  %v764 = vmul.f32 %v758, %v97
  %v765 = vmul.f32 %v758, %v101
  %v766 = vmul.f32 %v758, %v105
  %v767 = vmul.f32 %v758, %v109
  %v768 = vmul.f32 %v758, %v113
  %769 = vset.pattern.permute.xlu0 1
  %770 = vperm.xlu0 %769, %v19
  %v771 = vpop.permute.xlu0 %770
  %v773 = vmul.f32 %v771, %v175
  %v774 = vmul.f32 %v771, %v179
  %v775 = vmul.f32 %v771, %v183
  %v776 = vmul.f32 %v771, %v187
  %v777 = vmul.f32 %v771, %v191
  %v778 = vmul.f32 %v771, %v195
  %v779 = vmul.f32 %v771, %v199
  %v780 = vmul.f32 %v771, %v203
  %v781 = vmul.f32 %v771, %v207
  %v782 = vadd.f32 %v760, %v773
  %v783 = vadd.f32 %v761, %v774
  %v784 = vadd.f32 %v762, %v775
  %v785 = vadd.f32 %v763, %v776
  %v786 = vadd.f32 %v764, %v777
  %v787 = vadd.f32 %v765, %v778
  %v788 = vadd.f32 %v766, %v779
  %v789 = vadd.f32 %v767, %v780
  %v790 = vadd.f32 %v768, %v781
  %791 = vset.pattern.permute.xlu0 2
  %792 = vperm.xlu0 %791, %v19
  %v793 = vpop.permute.xlu0 %792
  %v795 = vmul.f32 %v793, %v278
  %v796 = vmul.f32 %v793, %v282
  %v797 = vmul.f32 %v793, %v286
  %v798 = vmul.f32 %v793, %v290
  %v799 = vmul.f32 %v793, %v294
  %v800 = vmul.f32 %v793, %v298
  %v801 = vmul.f32 %v793, %v302
  %v802 = vmul.f32 %v793, %v306
  %v803 = vmul.f32 %v793, %v310
  %v804 = vadd.f32 %v782, %v795
  %v805 = vadd.f32 %v783, %v796
  %v806 = vadd.f32 %v784, %v797
  %v807 = vadd.f32 %v785, %v798
  %v808 = vadd.f32 %v786, %v799
  %v809 = vadd.f32 %v787, %v800
  %v810 = vadd.f32 %v788, %v801
  %v811 = vadd.f32 %v789, %v802
  %v812 = vadd.f32 %v790, %v803
  %813 = vset.pattern.permute.xlu0 3
  %814 = vperm.xlu0 %813, %v19
  %v815 = vpop.permute.xlu0 %814
  %v817 = vmul.f32 %v815, %v381
  %v818 = vmul.f32 %v815, %v385
  %v819 = vmul.f32 %v815, %v389
  %v820 = vmul.f32 %v815, %v393
  %v821 = vmul.f32 %v815, %v397
  %v822 = vmul.f32 %v815, %v401
  %v823 = vmul.f32 %v815, %v405
  %v824 = vmul.f32 %v815, %v409
  %v825 = vmul.f32 %v815, %v413
  %v826 = vadd.f32 %v804, %v817
  %v827 = vadd.f32 %v805, %v818
  %v828 = vadd.f32 %v806, %v819
  %v829 = vadd.f32 %v807, %v820
  %v830 = vadd.f32 %v808, %v821
  %v831 = vadd.f32 %v809, %v822
  %v832 = vadd.f32 %v810, %v823
  %v833 = vadd.f32 %v811, %v824
  %v834 = vadd.f32 %v812, %v825
  %s836 = sor.u32 256, 66
  %837 = vrot.lane.b32.xlu0 %v826, %s836
  %v838 = vpop.permute.xlu0 %837
  %s840 = sor.u32 256, 66
  %841 = vrot.lane.b32.xlu0 %v827, %s840
  %v842 = vpop.permute.xlu0 %841
  %s844 = sor.u32 256, 66
  %845 = vrot.lane.b32.xlu0 %v828, %s844
  %v846 = vpop.permute.xlu0 %845
  %s848 = sor.u32 256, 66
  %849 = vrot.lane.b32.xlu0 %v829, %s848
  %v850 = vpop.permute.xlu0 %849
  %s852 = sor.u32 256, 66
  %853 = vrot.lane.b32.xlu0 %v830, %s852
  %v854 = vpop.permute.xlu0 %853
  %s856 = sor.u32 256, 66
  %857 = vrot.lane.b32.xlu0 %v831, %s856
  %v858 = vpop.permute.xlu0 %857
  %s860 = sor.u32 256, 66
  %861 = vrot.lane.b32.xlu0 %v832, %s860
  %v862 = vpop.permute.xlu0 %861
  %s864 = sor.u32 256, 66
  %865 = vrot.lane.b32.xlu0 %v833, %s864
  %v866 = vpop.permute.xlu0 %865
  %s868 = sor.u32 256, 66
  %869 = vrot.lane.b32.xlu0 %v834, %s868
  %v870 = vpop.permute.xlu0 %869
  %v871 = vadd.s32 %v469, 66
  %vm872 = vcmp.lt.s32.totalorder %v472, %v871
  %v873 = vsel %vm872, %v866, %v870
  %v874 = vsel %vm872, %v862, %v866
  %v875 = vsel %vm872, %v858, %v862
  %v876 = vsel %vm872, %v854, %v858
  %v877 = vsel %vm872, %v850, %v854
  %v878 = vsel %vm872, %v846, %v850
  %v879 = vsel %vm872, %v842, %v846
  %v880 = vsel %vm872, %v838, %v842
  %v881 = vsel %vm872, %v870, %v838
  %v882 = vadd.f32 %v746, %v881
  %v883 = vadd.f32 %v747, %v880
  %v884 = vadd.f32 %v748, %v879
  %v885 = vadd.f32 %v749, %v878
  %v886 = vadd.f32 %v750, %v877
  %v887 = vadd.f32 %v751, %v876
  %v888 = vadd.f32 %v752, %v875
  %v889 = vadd.f32 %v753, %v874
  %v890 = vadd.f32 %v754, %v873
  %892 = vset.pattern.permute.xlu0 0
  %893 = vperm.xlu0 %892, %v20
  %v894 = vpop.permute.xlu0 %893
  %v896 = vmul.f32 %v894, %v81
  %v897 = vmul.f32 %v894, %v85
  %v898 = vmul.f32 %v894, %v89
  %v899 = vmul.f32 %v894, %v93
  %v900 = vmul.f32 %v894, %v97
  %v901 = vmul.f32 %v894, %v101
  %v902 = vmul.f32 %v894, %v105
  %v903 = vmul.f32 %v894, %v109
  %v904 = vmul.f32 %v894, %v113
  %905 = vset.pattern.permute.xlu0 1
  %906 = vperm.xlu0 %905, %v20
  %v907 = vpop.permute.xlu0 %906
  %v909 = vmul.f32 %v907, %v175
  %v910 = vmul.f32 %v907, %v179
  %v911 = vmul.f32 %v907, %v183
  %v912 = vmul.f32 %v907, %v187
  %v913 = vmul.f32 %v907, %v191
  %v914 = vmul.f32 %v907, %v195
  %v915 = vmul.f32 %v907, %v199
  %v916 = vmul.f32 %v907, %v203
  %v917 = vmul.f32 %v907, %v207
  %v918 = vadd.f32 %v896, %v909
  %v919 = vadd.f32 %v897, %v910
  %v920 = vadd.f32 %v898, %v911
  %v921 = vadd.f32 %v899, %v912
  %v922 = vadd.f32 %v900, %v913
  %v923 = vadd.f32 %v901, %v914
  %v924 = vadd.f32 %v902, %v915
  %v925 = vadd.f32 %v903, %v916
  %v926 = vadd.f32 %v904, %v917
  %927 = vset.pattern.permute.xlu0 2
  %928 = vperm.xlu0 %927, %v20
  %v929 = vpop.permute.xlu0 %928
  %v931 = vmul.f32 %v929, %v278
  %v932 = vmul.f32 %v929, %v282
  %v933 = vmul.f32 %v929, %v286
  %v934 = vmul.f32 %v929, %v290
  %v935 = vmul.f32 %v929, %v294
  %v936 = vmul.f32 %v929, %v298
  %v937 = vmul.f32 %v929, %v302
  %v938 = vmul.f32 %v929, %v306
  %v939 = vmul.f32 %v929, %v310
  %v940 = vadd.f32 %v918, %v931
  %v941 = vadd.f32 %v919, %v932
  %v942 = vadd.f32 %v920, %v933
  %v943 = vadd.f32 %v921, %v934
  %v944 = vadd.f32 %v922, %v935
  %v945 = vadd.f32 %v923, %v936
  %v946 = vadd.f32 %v924, %v937
  %v947 = vadd.f32 %v925, %v938
  %v948 = vadd.f32 %v926, %v939
  %949 = vset.pattern.permute.xlu0 3
  %950 = vperm.xlu0 %949, %v20
  %v951 = vpop.permute.xlu0 %950
  %v953 = vmul.f32 %v951, %v381
  %v954 = vmul.f32 %v951, %v385
  %v955 = vmul.f32 %v951, %v389
  %v956 = vmul.f32 %v951, %v393
  %v957 = vmul.f32 %v951, %v397
  %v958 = vmul.f32 %v951, %v401
  %v959 = vmul.f32 %v951, %v405
  %v960 = vmul.f32 %v951, %v409
  %v961 = vmul.f32 %v951, %v413
  %v962 = vadd.f32 %v940, %v953
  %v963 = vadd.f32 %v941, %v954
  %v964 = vadd.f32 %v942, %v955
  %v965 = vadd.f32 %v943, %v956
  %v966 = vadd.f32 %v944, %v957
  %v967 = vadd.f32 %v945, %v958
  %v968 = vadd.f32 %v946, %v959
  %v969 = vadd.f32 %v947, %v960
  %v970 = vadd.f32 %v948, %v961
  %s972 = sor.u32 256, 44
  %973 = vrot.lane.b32.xlu0 %v962, %s972
  %v974 = vpop.permute.xlu0 %973
  %s976 = sor.u32 256, 44
  %977 = vrot.lane.b32.xlu0 %v963, %s976
  %v978 = vpop.permute.xlu0 %977
  %s980 = sor.u32 256, 44
  %981 = vrot.lane.b32.xlu0 %v964, %s980
  %v982 = vpop.permute.xlu0 %981
  %s984 = sor.u32 256, 44
  %985 = vrot.lane.b32.xlu0 %v965, %s984
  %v986 = vpop.permute.xlu0 %985
  %s988 = sor.u32 256, 44
  %989 = vrot.lane.b32.xlu0 %v966, %s988
  %v990 = vpop.permute.xlu0 %989
  %s992 = sor.u32 256, 44
  %993 = vrot.lane.b32.xlu0 %v967, %s992
  %v994 = vpop.permute.xlu0 %993
  %s996 = sor.u32 256, 44
  %997 = vrot.lane.b32.xlu0 %v968, %s996
  %v998 = vpop.permute.xlu0 %997
  %s1000 = sor.u32 256, 44
  %1001 = vrot.lane.b32.xlu0 %v969, %s1000
  %v1002 = vpop.permute.xlu0 %1001
  %s1004 = sor.u32 256, 44
  %1005 = vrot.lane.b32.xlu0 %v970, %s1004
  %v1006 = vpop.permute.xlu0 %1005
  %v1007 = vadd.s32 %v469, 44
  %vm1008 = vcmp.lt.s32.totalorder %v472, %v1007
  %v1009 = vsel %vm1008, %v1002, %v1006
  %v1010 = vsel %vm1008, %v998, %v1002
  %v1011 = vsel %vm1008, %v994, %v998
  %v1012 = vsel %vm1008, %v990, %v994
  %v1013 = vsel %vm1008, %v986, %v990
  %v1014 = vsel %vm1008, %v982, %v986
  %v1015 = vsel %vm1008, %v978, %v982
  %v1016 = vsel %vm1008, %v974, %v978
  %v1017 = vsel %vm1008, %v1006, %v974
  %v1018 = vadd.f32 %v882, %v1017
  %v1019 = vadd.f32 %v883, %v1016
  %v1020 = vadd.f32 %v884, %v1015
  %v1021 = vadd.f32 %v885, %v1014
  %v1022 = vadd.f32 %v886, %v1013
  %v1023 = vadd.f32 %v887, %v1012
  %v1024 = vadd.f32 %v888, %v1011
  %v1025 = vadd.f32 %v889, %v1010
  %v1026 = vadd.f32 %v890, %v1009
  %1028 = vset.pattern.permute.xlu0 0
  %1029 = vperm.xlu0 %1028, %v21
  %v1030 = vpop.permute.xlu0 %1029
  %v1032 = vmul.f32 %v1030, %v81
  %v1033 = vmul.f32 %v1030, %v85
  %v1034 = vmul.f32 %v1030, %v89
  %v1035 = vmul.f32 %v1030, %v93
  %v1036 = vmul.f32 %v1030, %v97
  %v1037 = vmul.f32 %v1030, %v101
  %v1038 = vmul.f32 %v1030, %v105
  %v1039 = vmul.f32 %v1030, %v109
  %v1040 = vmul.f32 %v1030, %v113
  %1041 = vset.pattern.permute.xlu0 1
  %1042 = vperm.xlu0 %1041, %v21
  %v1043 = vpop.permute.xlu0 %1042
  %v1045 = vmul.f32 %v1043, %v175
  %v1046 = vmul.f32 %v1043, %v179
  %v1047 = vmul.f32 %v1043, %v183
  %v1048 = vmul.f32 %v1043, %v187
  %v1049 = vmul.f32 %v1043, %v191
  %v1050 = vmul.f32 %v1043, %v195
  %v1051 = vmul.f32 %v1043, %v199
  %v1052 = vmul.f32 %v1043, %v203
  %v1053 = vmul.f32 %v1043, %v207
  %v1054 = vadd.f32 %v1032, %v1045
  %v1055 = vadd.f32 %v1033, %v1046
  %v1056 = vadd.f32 %v1034, %v1047
  %v1057 = vadd.f32 %v1035, %v1048
  %v1058 = vadd.f32 %v1036, %v1049
  %v1059 = vadd.f32 %v1037, %v1050
  %v1060 = vadd.f32 %v1038, %v1051
  %v1061 = vadd.f32 %v1039, %v1052
  %v1062 = vadd.f32 %v1040, %v1053
  %1063 = vset.pattern.permute.xlu0 2
  %1064 = vperm.xlu0 %1063, %v21
  %v1065 = vpop.permute.xlu0 %1064
  %v1067 = vmul.f32 %v1065, %v278
  %v1068 = vmul.f32 %v1065, %v282
  %v1069 = vmul.f32 %v1065, %v286
  %v1070 = vmul.f32 %v1065, %v290
  %v1071 = vmul.f32 %v1065, %v294
  %v1072 = vmul.f32 %v1065, %v298
  %v1073 = vmul.f32 %v1065, %v302
  %v1074 = vmul.f32 %v1065, %v306
  %v1075 = vmul.f32 %v1065, %v310
  %v1076 = vadd.f32 %v1054, %v1067
  %v1077 = vadd.f32 %v1055, %v1068
  %v1078 = vadd.f32 %v1056, %v1069
  %v1079 = vadd.f32 %v1057, %v1070
  %v1080 = vadd.f32 %v1058, %v1071
  %v1081 = vadd.f32 %v1059, %v1072
  %v1082 = vadd.f32 %v1060, %v1073
  %v1083 = vadd.f32 %v1061, %v1074
  %v1084 = vadd.f32 %v1062, %v1075
  %1085 = vset.pattern.permute.xlu0 3
  %1086 = vperm.xlu0 %1085, %v21
  %v1087 = vpop.permute.xlu0 %1086
  %v1089 = vmul.f32 %v1087, %v381
  %v1090 = vmul.f32 %v1087, %v385
  %v1091 = vmul.f32 %v1087, %v389
  %v1092 = vmul.f32 %v1087, %v393
  %v1093 = vmul.f32 %v1087, %v397
  %v1094 = vmul.f32 %v1087, %v401
  %v1095 = vmul.f32 %v1087, %v405
  %v1096 = vmul.f32 %v1087, %v409
  %v1097 = vmul.f32 %v1087, %v413
  %v1098 = vadd.f32 %v1076, %v1089
  %v1099 = vadd.f32 %v1077, %v1090
  %v1100 = vadd.f32 %v1078, %v1091
  %v1101 = vadd.f32 %v1079, %v1092
  %v1102 = vadd.f32 %v1080, %v1093
  %v1103 = vadd.f32 %v1081, %v1094
  %v1104 = vadd.f32 %v1082, %v1095
  %v1105 = vadd.f32 %v1083, %v1096
  %v1106 = vadd.f32 %v1084, %v1097
  %s1108 = sor.u32 256, 22
  %1109 = vrot.lane.b32.xlu0 %v1098, %s1108
  %v1110 = vpop.permute.xlu0 %1109
  %s1112 = sor.u32 256, 22
  %1113 = vrot.lane.b32.xlu0 %v1099, %s1112
  %v1114 = vpop.permute.xlu0 %1113
  %s1116 = sor.u32 256, 22
  %1117 = vrot.lane.b32.xlu0 %v1100, %s1116
  %v1118 = vpop.permute.xlu0 %1117
  %s1120 = sor.u32 256, 22
  %1121 = vrot.lane.b32.xlu0 %v1101, %s1120
  %v1122 = vpop.permute.xlu0 %1121
  %s1124 = sor.u32 256, 22
  %1125 = vrot.lane.b32.xlu0 %v1102, %s1124
  %v1126 = vpop.permute.xlu0 %1125
  %s1128 = sor.u32 256, 22
  %1129 = vrot.lane.b32.xlu0 %v1103, %s1128
  %v1130 = vpop.permute.xlu0 %1129
  %s1132 = sor.u32 256, 22
  %1133 = vrot.lane.b32.xlu0 %v1104, %s1132
  %v1134 = vpop.permute.xlu0 %1133
  %s1136 = sor.u32 256, 22
  %1137 = vrot.lane.b32.xlu0 %v1105, %s1136
  %v1138 = vpop.permute.xlu0 %1137
  %s1140 = sor.u32 256, 22
  %1141 = vrot.lane.b32.xlu0 %v1106, %s1140
  %v1142 = vpop.permute.xlu0 %1141
  %v1143 = vadd.s32 %v469, 22
  %vm1144 = vcmp.lt.s32.totalorder %v472, %v1143
  %v1145 = vsel %vm1144, %v1138, %v1142
  %v1146 = vsel %vm1144, %v1134, %v1138
  %v1147 = vsel %vm1144, %v1130, %v1134
  %v1148 = vsel %vm1144, %v1126, %v1130
  %v1149 = vsel %vm1144, %v1122, %v1126
  %v1150 = vsel %vm1144, %v1118, %v1122
  %v1151 = vsel %vm1144, %v1114, %v1118
  %v1152 = vsel %vm1144, %v1110, %v1114
  %v1153 = vsel %vm1144, %v1142, %v1110
  %v1154 = vadd.f32 %v1018, %v1153
  %v1155 = vadd.f32 %v1019, %v1152
  %v1156 = vadd.f32 %v1020, %v1151
  %v1157 = vadd.f32 %v1021, %v1150
  %v1158 = vadd.f32 %v1022, %v1149
  %v1159 = vadd.f32 %v1023, %v1148
  %v1160 = vadd.f32 %v1024, %v1147
  %v1161 = vadd.f32 %v1025, %v1146
  %v1162 = vadd.f32 %v1026, %v1145
  %1164 = vset.pattern.permute.xlu0 0
  %1165 = vperm.xlu0 %1164, %v22
  %v1166 = vpop.permute.xlu0 %1165
  %v1168 = vmul.f32 %v1166, %v81
  %v1169 = vmul.f32 %v1166, %v85
  %v1170 = vmul.f32 %v1166, %v89
  %v1171 = vmul.f32 %v1166, %v93
  %v1172 = vmul.f32 %v1166, %v97
  %v1173 = vmul.f32 %v1166, %v101
  %v1174 = vmul.f32 %v1166, %v105
  %v1175 = vmul.f32 %v1166, %v109
  %v1176 = vmul.f32 %v1166, %v113
  %1177 = vset.pattern.permute.xlu0 1
  %1178 = vperm.xlu0 %1177, %v22
  %v1179 = vpop.permute.xlu0 %1178
  %v1181 = vmul.f32 %v1179, %v175
  %v1182 = vmul.f32 %v1179, %v179
  %v1183 = vmul.f32 %v1179, %v183
  %v1184 = vmul.f32 %v1179, %v187
  %v1185 = vmul.f32 %v1179, %v191
  %v1186 = vmul.f32 %v1179, %v195
  %v1187 = vmul.f32 %v1179, %v199
  %v1188 = vmul.f32 %v1179, %v203
  %v1189 = vmul.f32 %v1179, %v207
  %v1190 = vadd.f32 %v1168, %v1181
  %v1191 = vadd.f32 %v1169, %v1182
  %v1192 = vadd.f32 %v1170, %v1183
  %v1193 = vadd.f32 %v1171, %v1184
  %v1194 = vadd.f32 %v1172, %v1185
  %v1195 = vadd.f32 %v1173, %v1186
  %v1196 = vadd.f32 %v1174, %v1187
  %v1197 = vadd.f32 %v1175, %v1188
  %v1198 = vadd.f32 %v1176, %v1189
  %1199 = vset.pattern.permute.xlu0 2
  %1200 = vperm.xlu0 %1199, %v22
  %v1201 = vpop.permute.xlu0 %1200
  %v1203 = vmul.f32 %v1201, %v278
  %v1204 = vmul.f32 %v1201, %v282
  %v1205 = vmul.f32 %v1201, %v286
  %v1206 = vmul.f32 %v1201, %v290
  %v1207 = vmul.f32 %v1201, %v294
  %v1208 = vmul.f32 %v1201, %v298
  %v1209 = vmul.f32 %v1201, %v302
  %v1210 = vmul.f32 %v1201, %v306
  %v1211 = vmul.f32 %v1201, %v310
  %v1212 = vadd.f32 %v1190, %v1203
  %v1213 = vadd.f32 %v1191, %v1204
  %v1214 = vadd.f32 %v1192, %v1205
  %v1215 = vadd.f32 %v1193, %v1206
  %v1216 = vadd.f32 %v1194, %v1207
  %v1217 = vadd.f32 %v1195, %v1208
  %v1218 = vadd.f32 %v1196, %v1209
  %v1219 = vadd.f32 %v1197, %v1210
  %v1220 = vadd.f32 %v1198, %v1211
  %1221 = vset.pattern.permute.xlu0 3
  %1222 = vperm.xlu0 %1221, %v22
  %v1223 = vpop.permute.xlu0 %1222
  %v1225 = vmul.f32 %v1223, %v381
  %v1226 = vmul.f32 %v1223, %v385
  %v1227 = vmul.f32 %v1223, %v389
  %v1228 = vmul.f32 %v1223, %v393
  %v1229 = vmul.f32 %v1223, %v397
  %v1230 = vmul.f32 %v1223, %v401
  %v1231 = vmul.f32 %v1223, %v405
  %v1232 = vmul.f32 %v1223, %v409
  %v1233 = vmul.f32 %v1223, %v413
  %v1234 = vadd.f32 %v1212, %v1225
  %v1235 = vadd.f32 %v1213, %v1226
  %v1236 = vadd.f32 %v1214, %v1227
  %v1237 = vadd.f32 %v1215, %v1228
  %v1238 = vadd.f32 %v1216, %v1229
  %v1239 = vadd.f32 %v1217, %v1230
  %v1240 = vadd.f32 %v1218, %v1231
  %v1241 = vadd.f32 %v1219, %v1232
  %v1242 = vadd.f32 %v1220, %v1233
  %1244 = vrot.lane.b32.xlu0 %v1234, 256
  %v1245 = vpop.permute.xlu0 %1244
  %1247 = vrot.lane.b32.xlu0 %v1235, 256
  %v1248 = vpop.permute.xlu0 %1247
  %1250 = vrot.lane.b32.xlu0 %v1236, 256
  %v1251 = vpop.permute.xlu0 %1250
  %1253 = vrot.lane.b32.xlu0 %v1237, 256
  %v1254 = vpop.permute.xlu0 %1253
  %1256 = vrot.lane.b32.xlu0 %v1238, 256
  %v1257 = vpop.permute.xlu0 %1256
  %1259 = vrot.lane.b32.xlu0 %v1239, 256
  %v1260 = vpop.permute.xlu0 %1259
  %1262 = vrot.lane.b32.xlu0 %v1240, 256
  %v1263 = vpop.permute.xlu0 %1262
  %1265 = vrot.lane.b32.xlu0 %v1241, 256
  %v1266 = vpop.permute.xlu0 %1265
  %1268 = vrot.lane.b32.xlu0 %v1242, 256
  %v1269 = vpop.permute.xlu0 %1268
  %vm1270 = vcmp.lt.s32.totalorder %v472, %v469
  %v1271 = vsel %vm1270, %v1266, %v1269
  %v1272 = vsel %vm1270, %v1263, %v1266
  %v1273 = vsel %vm1270, %v1260, %v1263
  %v1274 = vsel %vm1270, %v1257, %v1260
  %v1275 = vsel %vm1270, %v1254, %v1257
  %v1276 = vsel %vm1270, %v1251, %v1254
  %v1277 = vsel %vm1270, %v1248, %v1251
  %v1278 = vsel %vm1270, %v1245, %v1248
  %v1279 = vsel %vm1270, %v1269, %v1245
  %v1280 = vadd.f32 %v1154, %v1279
  %v1281 = vadd.f32 %v1155, %v1278
  %v1282 = vadd.f32 %v1156, %v1277
  %v1283 = vadd.f32 %v1157, %v1276
  %v1284 = vadd.f32 %v1158, %v1275
  %v1285 = vadd.f32 %v1159, %v1274
  %v1286 = vadd.f32 %v1160, %v1273
  %v1287 = vadd.f32 %v1161, %v1272
  %v1288 = vadd.f32 %v1162, %v1271
  %v1289 = vrot.slane %v1280, 4
  %v1290 = vadd.f32 %v1280, %v1289
  %v1291 = vrot.slane %v1290, 2
  %v1292 = vadd.f32 %v1290, %v1291
  %v1293 = vrot.slane %v1292, 1
  %v1294 = vadd.f32 %v1292, %v1293
  %v1295 = vrot.slane %v1281, 4
  %v1296 = vadd.f32 %v1281, %v1295
  %v1297 = vrot.slane %v1296, 2
  %v1298 = vadd.f32 %v1296, %v1297
  %v1299 = vrot.slane %v1298, 1
  %v1300 = vadd.f32 %v1298, %v1299
  %v1301 = vrot.slane %v1282, 4
  %v1302 = vadd.f32 %v1282, %v1301
  %v1303 = vrot.slane %v1302, 2
  %v1304 = vadd.f32 %v1302, %v1303
  %v1305 = vrot.slane %v1304, 1
  %v1306 = vadd.f32 %v1304, %v1305
  %v1307 = vrot.slane %v1283, 4
  %v1308 = vadd.f32 %v1283, %v1307
  %v1309 = vrot.slane %v1308, 2
  %v1310 = vadd.f32 %v1308, %v1309
  %v1311 = vrot.slane %v1310, 1
  %v1312 = vadd.f32 %v1310, %v1311
  %v1313 = vrot.slane %v1284, 4
  %v1314 = vadd.f32 %v1284, %v1313
  %v1315 = vrot.slane %v1314, 2
  %v1316 = vadd.f32 %v1314, %v1315
  %v1317 = vrot.slane %v1316, 1
  %v1318 = vadd.f32 %v1316, %v1317
  %v1319 = vrot.slane %v1285, 4
  %v1320 = vadd.f32 %v1285, %v1319
  %v1321 = vrot.slane %v1320, 2
  %v1322 = vadd.f32 %v1320, %v1321
  %v1323 = vrot.slane %v1322, 1
  %v1324 = vadd.f32 %v1322, %v1323
  %v1325 = vrot.slane %v1286, 4
  %v1326 = vadd.f32 %v1286, %v1325
  %v1327 = vrot.slane %v1326, 2
  %v1328 = vadd.f32 %v1326, %v1327
  %v1329 = vrot.slane %v1328, 1
  %v1330 = vadd.f32 %v1328, %v1329
  %v1331 = vrot.slane %v1287, 4
  %v1332 = vadd.f32 %v1287, %v1331
  %v1333 = vrot.slane %v1332, 2
  %v1334 = vadd.f32 %v1332, %v1333
  %v1335 = vrot.slane %v1334, 1
  %v1336 = vadd.f32 %v1334, %v1335
  %v1337 = vrot.slane %v1288, 4
  %v1338 = vadd.f32 %v1288, %v1337
  %v1339 = vrot.slane %v1338, 2
  %v1340 = vadd.f32 %v1338, %v1339
  %v1341 = vrot.slane %v1340, 1
  %v1342 = vadd.f32 %v1340, %v1341
  %v1352 = vcombine.low %v1294, %v1300
  %v1353 = vcombine.low %v1306, %v1312
  %v1354 = vcombine.low %v1318, %v1324
  %v1355 = vcombine.low %v1330, %v1336
  %v1357 = vunpack.c.l.s4 1966171168
  %v1358 = vunpack.c.0.s8 %v1357
  %v1359 = vlaneseq
  %v1360 = vshrl.u32 %v1359, 7
  %v1361 = vsub.s32 %v1358, %v1360
  %v1362 = vrot.slane %v1352, %v1361
  %v1364 = vunpack.c.l.s4 1966171168
  %v1365 = vunpack.c.0.s8 %v1364
  %v1366 = vlaneseq
  %v1367 = vshrl.u32 %v1366, 7
  %v1368 = vsub.s32 %v1365, %v1367
  %v1369 = vrot.slane %v1353, %v1368
  %v1371 = vunpack.c.l.s4 1966171168
  %v1372 = vunpack.c.0.s8 %v1371
  %v1373 = vlaneseq
  %v1374 = vshrl.u32 %v1373, 7
  %v1375 = vsub.s32 %v1372, %v1374
  %v1376 = vrot.slane %v1354, %v1375
  %v1378 = vunpack.c.l.s4 1966171168
  %v1379 = vunpack.c.0.s8 %v1378
  %v1380 = vlaneseq
  %v1381 = vshrl.u32 %v1380, 7
  %v1382 = vsub.s32 %v1379, %v1381
  %v1383 = vrot.slane %v1355, %v1382
  %v1384 = vcombine.low %v1362, %v1369
  %v1385 = vcombine.low %v1376, %v1383
  %v1387 = vunpack.c.l.s4 1966171168
  %v1388 = vunpack.c.0.s8 %v1387
  %v1389 = vlaneseq
  %v1390 = vshrl.u32 %v1389, 7
  %v1391 = vsub.s32 %v1388, %v1390
  %v1392 = vrot.slane %v1384, %v1391
  %v1394 = vunpack.c.l.s4 1966171168
  %v1395 = vunpack.c.0.s8 %v1394
  %v1396 = vlaneseq
  %v1397 = vshrl.u32 %v1396, 7
  %v1398 = vsub.s32 %v1395, %v1397
  %v1399 = vrot.slane %v1385, %v1398
  %v1400 = vcombine.low %v1392, %v1399
  %v1402 = vunpack.c.l.s4 1966171168
  %v1403 = vunpack.c.0.s8 %v1402
  %v1404 = vlaneseq
  %v1405 = vshrl.u32 %v1404, 7
  %v1406 = vsub.s32 %v1403, %v1405
  %v1407 = vrot.slane %v1342, %v1406
  %v1409 = vunpack.c.l.s4 1966171168
  %v1410 = vunpack.c.0.s8 %v1409
  %v1411 = vlaneseq
  %v1412 = vshrl.u32 %v1411, 7
  %v1413 = vsub.s32 %v1410, %v1412
  %v1414 = vrot.slane %v1407, %v1413
  %1417 = vst [vmem:[%s2] sm:$0xff] %v1400
  %v1418 = vlaneseq
  %vm1419 = vcmp.ge.s32.totalorder %v1418, 0
  %vm1420 = vcmp.lt.s32.totalorder %v1418, 128
  %vm1421 = vmand %vm1419, %vm1420
  %1422 = vst.msk [vmem:[%s2 + $0x8] sm:$0x1] %vm1421, %v1414
  // Predicated region
  $region10: #{cfconv1_forward.1} parent=0 // pred_check
    _
  $region11: #{cfconv1_forward.1} parent=0 // pred_check_branch
    %1424 = sbr.rel (0) target = $region13
  $region12: #{cfconv1_forward.1} parent=0 // pred_region
    _
  $region13: #{cfconv1_forward.1} parent=0 // pred_fallthru
    _
  // Predicated region
  $region14: #{cfconv1_forward.1} parent=0 // pred_check
    _
  $region15: #{cfconv1_forward.1} parent=0 // pred_check_branch
    %1426 = sbr.rel (0) target = $region17
  $region16: #{cfconv1_forward.1} parent=0 // pred_region
    _
  $region17: #{cfconv1_forward.1} parent=0 // pred_fallthru
    _

</llo_original>
